<compile_context>
chip_gen: v6e
topology: v6e:2x2x1
jax: 0.10.0
libtpu: 0.0.40
codegen_flags: <defaults>
</compile_context>

<pallas_src>
import functools

import jax
import jax.numpy as jnp
from jax.experimental import pallas as pl
from jax.experimental.pallas import tpu as pltpu


def _rnn_kernel(
    x_ref, h1_ref, h2_ref,
    wband_ref, b1_ref, whh1_ref, wih2_ref, whh2_ref, b2_ref,
    wblk_ref, bfc_ref,
    out_ref, h1o_ref, h2o_ref,
    h2all_ref,
    *, seq_len, hidden,
):
  h1 = h1_ref[...]                      # (B, H)
  h2 = h2_ref[...]                      # (B, H)
  whh1 = whh1_ref[...]                  # (H, H)  = Whh1.T
  wih2 = wih2_ref[...]                  # (H, H)  = Wih2.T
  whh2 = whh2_ref[...]                  # (H, H)  = Whh2.T

  # All-steps input projection, off the recurrence path: one matmul against
  # the banded weight gives xproj[:, t*H:(t+1)*H] == x[:, t:t+T] @ Wih1.T,
  # with (b_ih1 + b_hh1) folded in (pre-tiled along the lane axis).
  xproj = (jnp.dot(x_ref[...], wband_ref[...],
                   preferred_element_type=jnp.float32) + b1_ref[...])

  # Hoisted bias broadcast (broadcast_in_dim is not CSE'd across the unroll).
  b2 = jnp.broadcast_to(b2_ref[...], h2.shape)

  # seq_len is small and static -> fully-unrolled loop gives the LLO scheduler
  # cross-step visibility to hide independent work in dependence-chain bubbles.
  for t in range(seq_len):
    # Depends only on h2_{t-1}: overlaps with layer-1's matmul/tanh below.
    p2 = jnp.dot(h2, whh2, preferred_element_type=jnp.float32) + b2
    xp_t = xproj[:, t * hidden:(t + 1) * hidden]                 # static slice
    h1 = jnp.tanh(
        xp_t + jnp.dot(h1, whh1, preferred_element_type=jnp.float32))
    h2 = jnp.tanh(
        jnp.dot(h1, wih2, preferred_element_type=jnp.float32) + p2)
    # Incremental placement into the (B, seq_len*H) accumulator; masked
    # 16-lane store that does not feed the recurrence.
    h2all_ref[:, t * hidden:(t + 1) * hidden] = h2

  # Deferred FC: one matmul against the block-diagonal weight yields the
  # (B, seq_len) output directly — no per-step width-1 matmuls, no epilogue
  # lane concatenate.
  out_ref[...] = (jnp.dot(h2all_ref[...], wblk_ref[...],
                          preferred_element_type=jnp.float32) + bfc_ref[...])
  h1o_ref[...] = h1
  h2o_ref[...] = h2


def shallow_regression_rnn(x, h1, h2, kernel_params, *, seq_len, time_steps,
                           batch_block=None):
  """kernel_params = output of _pack_params (pre-transposed / fused weights).

  batch_block=None -> single invocation, no grid (best at small batch).
  batch_block=k < batch -> batch-parallel grid (useful to shard a large batch
  across v7x's two TensorCores; still correct on single-TC chips).
  """
  batch, hidden = h1.shape
  x_len = x.shape[1]
  assert x_len >= seq_len + time_steps - 1, "x too short for the sliding window"
  sh = seq_len * hidden

  kernel = functools.partial(_rnn_kernel, seq_len=seq_len, hidden=hidden)
  out_shapes = (
      jax.ShapeDtypeStruct((batch, seq_len), jnp.float32),
      jax.ShapeDtypeStruct((batch, hidden), jnp.float32),
      jax.ShapeDtypeStruct((batch, hidden), jnp.float32),
  )

  if batch_block is None or batch_block >= batch:
    # Single invocation, full-array VMEM blocks: footprint is KiB-scale, so
    # no tiling / grid / vmem_limit tweaks on any generation.
    vmem = pl.BlockSpec(memory_space=pltpu.MemorySpace.VMEM)
    return pl.pallas_call(
        kernel,
        out_shape=out_shapes,
        in_specs=[vmem] * (3 + len(kernel_params)),
        out_specs=(vmem, vmem, vmem),
        scratch_shapes=[pltpu.VMEM((batch, sh), jnp.float32)],
    )(x, h1, h2, *kernel_params)

  # Batch-parallel grid path (recurrence stays serial within each block).
  assert batch % batch_block == 0
  rep = lambda shp: pl.BlockSpec(shp, lambda i: (0, 0))          # replicated
  bat = lambda cols: pl.BlockSpec((batch_block, cols), lambda i: (i, 0))
  in_specs = [
      bat(x_len),                      # x
      bat(hidden),                     # h1
      bat(hidden),                     # h2
      rep((x_len, sh)),                # banded Wih1
      rep((1, sh)),                    # tiled (b_ih1 + b_hh1)
      rep((hidden, hidden)),           # Whh1.T
      rep((hidden, hidden)),           # Wih2.T
      rep((hidden, hidden)),           # Whh2.T
      rep((1, hidden)),                # b_ih2 + b_hh2
      rep((sh, seq_len)),              # block-diagonal Wfc
      rep((1, 1)),                     # b_fc
  ]
  out_specs = (bat(seq_len), bat(hidden), bat(hidden))
  return pl.pallas_call(
      kernel,
      out_shape=out_shapes,
      grid=(batch // batch_block,),
      in_specs=in_specs,
      out_specs=out_specs,
      scratch_shapes=[pltpu.VMEM((batch_block, sh), jnp.float32)],
      compiler_params=pltpu.CompilerParams(
          dimension_semantics=("parallel",)),
  )(x, h1, h2, *kernel_params)


def _init_params(key, time_steps, hidden_dim):
  """Raw PyTorch-layout params, U(-1/sqrt(H), 1/sqrt(H)) like nn.RNNCell/Linear."""
  k = 1.0 / jnp.sqrt(jnp.float32(hidden_dim))
  keys = jax.random.split(key, 10)
  u = lambda kk, shape: jax.random.uniform(kk, shape, jnp.float32, -k, k)
  wih1 = u(keys[0], (hidden_dim, time_steps))
  whh1 = u(keys[1], (hidden_dim, hidden_dim))
  b_ih1 = u(keys[2], (hidden_dim,))
  b_hh1 = u(keys[3], (hidden_dim,))
  wih2 = u(keys[4], (hidden_dim, hidden_dim))
  whh2 = u(keys[5], (hidden_dim, hidden_dim))
  b_ih2 = u(keys[6], (hidden_dim,))
  b_hh2 = u(keys[7], (hidden_dim,))
  wfc = u(keys[8], (1, hidden_dim))
  bfc = u(keys[9], (1,))
  return (wih1, whh1, b_ih1, b_hh1, wih2, whh2, b_ih2, b_hh2, wfc, bfc)


def _pack_params(raw, seq_len, time_steps, hidden, x_len):
  """Pre-transpose / fold weights for the kernel (pure layout, done once)."""
  wih1, whh1, b_ih1, b_hh1, wih2, whh2, b_ih2, b_hh2, wfc, bfc = raw
  wih1_t = wih1.T                                                # (T, H)
  # Banded sliding-window weight: W_band[t:t+T, t*H:(t+1)*H] = Wih1.T, so
  # x @ W_band computes every windowed input projection in one matmul.
  wband = jnp.zeros((x_len, seq_len * hidden), jnp.float32)
  for t in range(seq_len):
    wband = wband.at[t:t + time_steps, t * hidden:(t + 1) * hidden].set(wih1_t)
  b1_tiled = jnp.tile(b_ih1 + b_hh1, seq_len).reshape(1, seq_len * hidden)
  # Block-diagonal FC weight: (seq_len*H, seq_len) with Wfc.T in each block,
  # so one matmul lays the output out directly as (B, seq_len).
  # NOTE: relies on h2_t being stored at lanes [t*H:(t+1)*H] in time order.
  wblk = jnp.kron(jnp.eye(seq_len, dtype=jnp.float32), wfc.T)   # (seq*H, seq)
  return (
      wband,                                                     # (x_len, seq*H)
      b1_tiled,                                                  # (1, seq*H)
      whh1.T,                                                    # (H, H)
      wih2.T,                                                    # (H, H)
      whh2.T,                                                    # (H, H)
      (b_ih2 + b_hh2).reshape(1, hidden),                        # (1, H)
      wblk,                                                      # (seq*H, seq)
      bfc.reshape(1, 1),                                         # (1, 1)
  )


def _reference(x, h1, h2, raw, seq_len, time_steps):
  """Pure-JAX reference matching the PyTorch forward exactly."""
  wih1, whh1, b_ih1, b_hh1, wih2, whh2, b_ih2, b_hh2, wfc, bfc = raw
  cols = []
  for t in range(seq_len):
    h1 = jnp.tanh(x[:, t:t + time_steps] @ wih1.T + b_ih1 + h1 @ whh1.T + b_hh1)
    h2 = jnp.tanh(h1 @ wih2.T + b_ih2 + h2 @ whh2.T + b_hh2)
    cols.append(h2 @ wfc.T + bfc)
  return jnp.concatenate(cols, axis=1), h1, h2


if __name__ == "__main__":
  # Small shapes consistent with the module's forward (batch multiple of 8,
  # seq_len*hidden = 128 for a lane-dense output matmul).
  BATCH = 8
  TIME_STEPS = 32
  SEQ_LEN = 8
  HIDDEN = 16
  X_LEN = SEQ_LEN + TIME_STEPS - 1      # sliding window over x's columns

  key = jax.random.PRNGKey(0)
  kx, kparams, kx2 = jax.random.split(key, 3)

  x = jax.random.normal(kx, (BATCH, X_LEN), jnp.float32)
  h1 = jnp.zeros((BATCH, HIDDEN), jnp.float32)   # init_hidden()
  h2 = jnp.zeros((BATCH, HIDDEN), jnp.float32)   # init_hidden()
  raw_params = _init_params(kparams, TIME_STEPS, HIDDEN)
  packed_params = _pack_params(raw_params, SEQ_LEN, TIME_STEPS, HIDDEN, X_LEN)

  # Default path: single invocation, no grid.
  out_seq, h1_out, h2_out = shallow_regression_rnn(
      x, h1, h2, packed_params, seq_len=SEQ_LEN, time_steps=TIME_STEPS)
  jax.block_until_ready((out_seq, h1_out, h2_out))

  ref_out, ref_h1, ref_h2 = _reference(x, h1, h2, raw_params, SEQ_LEN, TIME_STEPS)
  assert out_seq.shape == (BATCH, SEQ_LEN)
  assert h1_out.shape == (BATCH, HIDDEN) and h2_out.shape == (BATCH, HIDDEN)
  assert jnp.allclose(out_seq, ref_out, atol=1e-4, rtol=1e-4)
  assert jnp.allclose(h1_out, ref_h1, atol=1e-4, rtol=1e-4)
  assert jnp.allclose(h2_out, ref_h2, atol=1e-4, rtol=1e-4)

  # Larger-batch path with the batch-parallel grid (v7x 2-TC sharding lever;
  # correct on single-TC v5e/v6e as well).
  BATCH_L = 64
  xl = jax.random.normal(kx2, (BATCH_L, X_LEN), jnp.float32)
  h1l = jnp.zeros((BATCH_L, HIDDEN), jnp.float32)
  h2l = jnp.zeros((BATCH_L, HIDDEN), jnp.float32)
  out_l, h1_l, h2_l = shallow_regression_rnn(
      xl, h1l, h2l, packed_params, seq_len=SEQ_LEN, time_steps=TIME_STEPS,
      batch_block=32)
  jax.block_until_ready((out_l, h1_l, h2_l))
  ref_ol, ref_h1l, ref_h2l = _reference(xl, h1l, h2l, raw_params,
                                        SEQ_LEN, TIME_STEPS)
  assert jnp.allclose(out_l, ref_ol, atol=1e-4, rtol=1e-4)
  assert jnp.allclose(h1_l, ref_h1l, atol=1e-4, rtol=1e-4)
  assert jnp.allclose(h2_l, ref_h2l, atol=1e-4, rtol=1e-4)

  print("KERNEL_OK")
</pallas_src>

<mosaic_0001>
module attributes {stable_mosaic.version = 11 : i64} {
  func.func @_rnn_kernel(%arg0: memref<8x39xf32, #tpu.memory_space<vmem>>, %arg1: memref<8x16xf32, #tpu.memory_space<vmem>>, %arg2: memref<8x16xf32, #tpu.memory_space<vmem>>, %arg3: memref<39x128xf32, #tpu.memory_space<vmem>>, %arg4: memref<1x128xf32, #tpu.memory_space<vmem>>, %arg5: memref<16x16xf32, #tpu.memory_space<vmem>>, %arg6: memref<16x16xf32, #tpu.memory_space<vmem>>, %arg7: memref<16x16xf32, #tpu.memory_space<vmem>>, %arg8: memref<1x16xf32, #tpu.memory_space<vmem>>, %arg9: memref<128x8xf32, #tpu.memory_space<vmem>>, %arg10: memref<1x1xf32, #tpu.memory_space<vmem>>, %arg11: memref<8x8xf32, #tpu.memory_space<vmem>>, %arg12: memref<8x16xf32, #tpu.memory_space<vmem>>, %arg13: memref<8x16xf32, #tpu.memory_space<vmem>>, %arg14: memref<8x128xf32, #tpu.memory_space<vmem>>) attributes {dimension_semantics = [], scalar_prefetch = 0 : i64, scratch_operands = 1 : i64, tpu.core_type = #tpu.core_type<tc>} {
    %c0 = arith.constant 0 : index
    %c0_0 = arith.constant 0 : index
    %0 = vector.load %arg1[%c0, %c0_0] : memref<8x16xf32, #tpu.memory_space<vmem>>, vector<8x16xf32>
    %c0_1 = arith.constant 0 : index
    %c0_2 = arith.constant 0 : index
    %1 = vector.load %arg2[%c0_1, %c0_2] : memref<8x16xf32, #tpu.memory_space<vmem>>, vector<8x16xf32>
    %c0_3 = arith.constant 0 : index
    %c0_4 = arith.constant 0 : index
    %2 = vector.load %arg5[%c0_3, %c0_4] : memref<16x16xf32, #tpu.memory_space<vmem>>, vector<16x16xf32>
    %c0_5 = arith.constant 0 : index
    %c0_6 = arith.constant 0 : index
    %3 = vector.load %arg6[%c0_5, %c0_6] : memref<16x16xf32, #tpu.memory_space<vmem>>, vector<16x16xf32>
    %c0_7 = arith.constant 0 : index
    %c0_8 = arith.constant 0 : index
    %4 = vector.load %arg7[%c0_7, %c0_8] : memref<16x16xf32, #tpu.memory_space<vmem>>, vector<16x16xf32>
    %c0_9 = arith.constant 0 : index
    %c0_10 = arith.constant 0 : index
    %5 = vector.load %arg0[%c0_9, %c0_10] : memref<8x39xf32, #tpu.memory_space<vmem>>, vector<8x39xf32>
    %c0_11 = arith.constant 0 : index
    %c0_12 = arith.constant 0 : index
    %6 = vector.load %arg3[%c0_11, %c0_12] : memref<39x128xf32, #tpu.memory_space<vmem>>, vector<39x128xf32>
    %cst = arith.constant dense<0.000000e+00> : vector<8x128xf32>
    %7 = tpu.matmul %5, %6, %cst {dimension_numbers = #tpu.dot_dimension_numbers<[1], [0], [0], [1], [0, 0, 1, 1], [], []>} : vector<8x39xf32>, vector<39x128xf32>, vector<8x128xf32> -> vector<8x128xf32>
    %c0_13 = arith.constant 0 : index
    %c0_14 = arith.constant 0 : index
    %8 = vector.load %arg4[%c0_13, %c0_14] : memref<1x128xf32, #tpu.memory_space<vmem>>, vector<1x128xf32>
    %9 = vector.broadcast %8 : vector<1x128xf32> to vector<8x128xf32>
    %10 = arith.addf %7, %9 : vector<8x128xf32>
    %c0_15 = arith.constant 0 : index
    %c0_16 = arith.constant 0 : index
    %11 = vector.load %arg8[%c0_15, %c0_16] : memref<1x16xf32, #tpu.memory_space<vmem>>, vector<1x16xf32>
    %12 = vector.shape_cast %11 : vector<1x16xf32> to vector<1x16xf32>
    %13 = vector.broadcast %12 : vector<1x16xf32> to vector<8x16xf32>
    %cst_17 = arith.constant dense<0.000000e+00> : vector<8x16xf32>
    %14 = tpu.matmul %1, %4, %cst_17 {dimension_numbers = #tpu.dot_dimension_numbers<[1], [0], [0], [1], [0, 0, 1, 1], [], []>} : vector<8x16xf32>, vector<16x16xf32>, vector<8x16xf32> -> vector<8x16xf32>
    %15 = arith.addf %14, %13 : vector<8x16xf32>
    %16 = vector.extract_strided_slice %10 {offsets = [0, 0], sizes = [8, 16], strides = [1, 1]} : vector<8x128xf32> to vector<8x16xf32>
    %cst_18 = arith.constant dense<0.000000e+00> : vector<8x16xf32>
    %17 = tpu.matmul %0, %2, %cst_18 {dimension_numbers = #tpu.dot_dimension_numbers<[1], [0], [0], [1], [0, 0, 1, 1], [], []>} : vector<8x16xf32>, vector<16x16xf32>, vector<8x16xf32> -> vector<8x16xf32>
    %18 = arith.addf %16, %17 : vector<8x16xf32>
    %19 = math.tanh %18 : vector<8x16xf32>
    %cst_19 = arith.constant dense<0.000000e+00> : vector<8x16xf32>
    %20 = tpu.matmul %19, %3, %cst_19 {dimension_numbers = #tpu.dot_dimension_numbers<[1], [0], [0], [1], [0, 0, 1, 1], [], []>} : vector<8x16xf32>, vector<16x16xf32>, vector<8x16xf32> -> vector<8x16xf32>
    %21 = arith.addf %20, %15 : vector<8x16xf32>
    %22 = math.tanh %21 : vector<8x16xf32>
    %c0_20 = arith.constant 0 : index
    %c0_21 = arith.constant 0 : index
    %23 = vector.load %arg14[%c0_20, %c0_21] : memref<8x128xf32, #tpu.memory_space<vmem>>, vector<8x16xf32>
    tpu.vector_store %arg14[%c0_20, %c0_21], %22 {strides = array<i32>} : memref<8x128xf32, #tpu.memory_space<vmem>>, vector<8x16xf32>,
    %cst_22 = arith.constant dense<0.000000e+00> : vector<8x16xf32>
    %24 = tpu.matmul %22, %4, %cst_22 {dimension_numbers = #tpu.dot_dimension_numbers<[1], [0], [0], [1], [0, 0, 1, 1], [], []>} : vector<8x16xf32>, vector<16x16xf32>, vector<8x16xf32> -> vector<8x16xf32>
    %25 = arith.addf %24, %13 : vector<8x16xf32>
    %26 = vector.extract_strided_slice %10 {offsets = [0, 16], sizes = [8, 16], strides = [1, 1]} : vector<8x128xf32> to vector<8x16xf32>
    %cst_23 = arith.constant dense<0.000000e+00> : vector<8x16xf32>
    %27 = tpu.matmul %19, %2, %cst_23 {dimension_numbers = #tpu.dot_dimension_numbers<[1], [0], [0], [1], [0, 0, 1, 1], [], []>} : vector<8x16xf32>, vector<16x16xf32>, vector<8x16xf32> -> vector<8x16xf32>
    %28 = arith.addf %26, %27 : vector<8x16xf32>
    %29 = math.tanh %28 : vector<8x16xf32>
    %cst_24 = arith.constant dense<0.000000e+00> : vector<8x16xf32>
    %30 = tpu.matmul %29, %3, %cst_24 {dimension_numbers = #tpu.dot_dimension_numbers<[1], [0], [0], [1], [0, 0, 1, 1], [], []>} : vector<8x16xf32>, vector<16x16xf32>, vector<8x16xf32> -> vector<8x16xf32>
    %31 = arith.addf %30, %25 : vector<8x16xf32>
    %32 = math.tanh %31 : vector<8x16xf32>
    %c0_25 = arith.constant 0 : index
    %c16 = arith.constant 16 : index
    %33 = vector.load %arg14[%c0_25, %c16] : memref<8x128xf32, #tpu.memory_space<vmem>>, vector<8x16xf32>
    tpu.vector_store %arg14[%c0_25, %c16], %32 {strides = array<i32>} : memref<8x128xf32, #tpu.memory_space<vmem>>, vector<8x16xf32>,
    %cst_26 = arith.constant dense<0.000000e+00> : vector<8x16xf32>
    %34 = tpu.matmul %32, %4, %cst_26 {dimension_numbers = #tpu.dot_dimension_numbers<[1], [0], [0], [1], [0, 0, 1, 1], [], []>} : vector<8x16xf32>, vector<16x16xf32>, vector<8x16xf32> -> vector<8x16xf32>
    %35 = arith.addf %34, %13 : vector<8x16xf32>
    %36 = vector.extract_strided_slice %10 {offsets = [0, 32], sizes = [8, 16], strides = [1, 1]} : vector<8x128xf32> to vector<8x16xf32>
    %cst_27 = arith.constant dense<0.000000e+00> : vector<8x16xf32>
    %37 = tpu.matmul %29, %2, %cst_27 {dimension_numbers = #tpu.dot_dimension_numbers<[1], [0], [0], [1], [0, 0, 1, 1], [], []>} : vector<8x16xf32>, vector<16x16xf32>, vector<8x16xf32> -> vector<8x16xf32>
    %38 = arith.addf %36, %37 : vector<8x16xf32>
    %39 = math.tanh %38 : vector<8x16xf32>
    %cst_28 = arith.constant dense<0.000000e+00> : vector<8x16xf32>
    %40 = tpu.matmul %39, %3, %cst_28 {dimension_numbers = #tpu.dot_dimension_numbers<[1], [0], [0], [1], [0, 0, 1, 1], [], []>} : vector<8x16xf32>, vector<16x16xf32>, vector<8x16xf32> -> vector<8x16xf32>
    %41 = arith.addf %40, %35 : vector<8x16xf32>
    %42 = math.tanh %41 : vector<8x16xf32>
    %c0_29 = arith.constant 0 : index
    %c32 = arith.constant 32 : index
    %43 = vector.load %arg14[%c0_29, %c32] : memref<8x128xf32, #tpu.memory_space<vmem>>, vector<8x16xf32>
    tpu.vector_store %arg14[%c0_29, %c32], %42 {strides = array<i32>} : memref<8x128xf32, #tpu.memory_space<vmem>>, vector<8x16xf32>,
    %cst_30 = arith.constant dense<0.000000e+00> : vector<8x16xf32>
    %44 = tpu.matmul %42, %4, %cst_30 {dimension_numbers = #tpu.dot_dimension_numbers<[1], [0], [0], [1], [0, 0, 1, 1], [], []>} : vector<8x16xf32>, vector<16x16xf32>, vector<8x16xf32> -> vector<8x16xf32>
    %45 = arith.addf %44, %13 : vector<8x16xf32>
    %46 = vector.extract_strided_slice %10 {offsets = [0, 48], sizes = [8, 16], strides = [1, 1]} : vector<8x128xf32> to vector<8x16xf32>
    %cst_31 = arith.constant dense<0.000000e+00> : vector<8x16xf32>
    %47 = tpu.matmul %39, %2, %cst_31 {dimension_numbers = #tpu.dot_dimension_numbers<[1], [0], [0], [1], [0, 0, 1, 1], [], []>} : vector<8x16xf32>, vector<16x16xf32>, vector<8x16xf32> -> vector<8x16xf32>
    %48 = arith.addf %46, %47 : vector<8x16xf32>
    %49 = math.tanh %48 : vector<8x16xf32>
    %cst_32 = arith.constant dense<0.000000e+00> : vector<8x16xf32>
    %50 = tpu.matmul %49, %3, %cst_32 {dimension_numbers = #tpu.dot_dimension_numbers<[1], [0], [0], [1], [0, 0, 1, 1], [], []>} : vector<8x16xf32>, vector<16x16xf32>, vector<8x16xf32> -> vector<8x16xf32>
    %51 = arith.addf %50, %45 : vector<8x16xf32>
    %52 = math.tanh %51 : vector<8x16xf32>
    %c0_33 = arith.constant 0 : index
    %c48 = arith.constant 48 : index
    %53 = vector.load %arg14[%c0_33, %c48] : memref<8x128xf32, #tpu.memory_space<vmem>>, vector<8x16xf32>
    tpu.vector_store %arg14[%c0_33, %c48], %52 {strides = array<i32>} : memref<8x128xf32, #tpu.memory_space<vmem>>, vector<8x16xf32>,
    %cst_34 = arith.constant dense<0.000000e+00> : vector<8x16xf32>
    %54 = tpu.matmul %52, %4, %cst_34 {dimension_numbers = #tpu.dot_dimension_numbers<[1], [0], [0], [1], [0, 0, 1, 1], [], []>} : vector<8x16xf32>, vector<16x16xf32>, vector<8x16xf32> -> vector<8x16xf32>
    %55 = arith.addf %54, %13 : vector<8x16xf32>
    %56 = vector.extract_strided_slice %10 {offsets = [0, 64], sizes = [8, 16], strides = [1, 1]} : vector<8x128xf32> to vector<8x16xf32>
    %cst_35 = arith.constant dense<0.000000e+00> : vector<8x16xf32>
    %57 = tpu.matmul %49, %2, %cst_35 {dimension_numbers = #tpu.dot_dimension_numbers<[1], [0], [0], [1], [0, 0, 1, 1], [], []>} : vector<8x16xf32>, vector<16x16xf32>, vector<8x16xf32> -> vector<8x16xf32>
    %58 = arith.addf %56, %57 : vector<8x16xf32>
    %59 = math.tanh %58 : vector<8x16xf32>
    %cst_36 = arith.constant dense<0.000000e+00> : vector<8x16xf32>
    %60 = tpu.matmul %59, %3, %cst_36 {dimension_numbers = #tpu.dot_dimension_numbers<[1], [0], [0], [1], [0, 0, 1, 1], [], []>} : vector<8x16xf32>, vector<16x16xf32>, vector<8x16xf32> -> vector<8x16xf32>
    %61 = arith.addf %60, %55 : vector<8x16xf32>
    %62 = math.tanh %61 : vector<8x16xf32>
    %c0_37 = arith.constant 0 : index
    %c64 = arith.constant 64 : index
    %63 = vector.load %arg14[%c0_37, %c64] : memref<8x128xf32, #tpu.memory_space<vmem>>, vector<8x16xf32>
    tpu.vector_store %arg14[%c0_37, %c64], %62 {strides = array<i32>} : memref<8x128xf32, #tpu.memory_space<vmem>>, vector<8x16xf32>,
    %cst_38 = arith.constant dense<0.000000e+00> : vector<8x16xf32>
    %64 = tpu.matmul %62, %4, %cst_38 {dimension_numbers = #tpu.dot_dimension_numbers<[1], [0], [0], [1], [0, 0, 1, 1], [], []>} : vector<8x16xf32>, vector<16x16xf32>, vector<8x16xf32> -> vector<8x16xf32>
    %65 = arith.addf %64, %13 : vector<8x16xf32>
    %66 = vector.extract_strided_slice %10 {offsets = [0, 80], sizes = [8, 16], strides = [1, 1]} : vector<8x128xf32> to vector<8x16xf32>
    %cst_39 = arith.constant dense<0.000000e+00> : vector<8x16xf32>
    %67 = tpu.matmul %59, %2, %cst_39 {dimension_numbers = #tpu.dot_dimension_numbers<[1], [0], [0], [1], [0, 0, 1, 1], [], []>} : vector<8x16xf32>, vector<16x16xf32>, vector<8x16xf32> -> vector<8x16xf32>
    %68 = arith.addf %66, %67 : vector<8x16xf32>
    %69 = math.tanh %68 : vector<8x16xf32>
    %cst_40 = arith.constant dense<0.000000e+00> : vector<8x16xf32>
    %70 = tpu.matmul %69, %3, %cst_40 {dimension_numbers = #tpu.dot_dimension_numbers<[1], [0], [0], [1], [0, 0, 1, 1], [], []>} : vector<8x16xf32>, vector<16x16xf32>, vector<8x16xf32> -> vector<8x16xf32>
    %71 = arith.addf %70, %65 : vector<8x16xf32>
    %72 = math.tanh %71 : vector<8x16xf32>
    %c0_41 = arith.constant 0 : index
    %c80 = arith.constant 80 : index
    %73 = vector.load %arg14[%c0_41, %c80] : memref<8x128xf32, #tpu.memory_space<vmem>>, vector<8x16xf32>
    tpu.vector_store %arg14[%c0_41, %c80], %72 {strides = array<i32>} : memref<8x128xf32, #tpu.memory_space<vmem>>, vector<8x16xf32>,
    %cst_42 = arith.constant dense<0.000000e+00> : vector<8x16xf32>
    %74 = tpu.matmul %72, %4, %cst_42 {dimension_numbers = #tpu.dot_dimension_numbers<[1], [0], [0], [1], [0, 0, 1, 1], [], []>} : vector<8x16xf32>, vector<16x16xf32>, vector<8x16xf32> -> vector<8x16xf32>
    %75 = arith.addf %74, %13 : vector<8x16xf32>
    %76 = vector.extract_strided_slice %10 {offsets = [0, 96], sizes = [8, 16], strides = [1, 1]} : vector<8x128xf32> to vector<8x16xf32>
    %cst_43 = arith.constant dense<0.000000e+00> : vector<8x16xf32>
    %77 = tpu.matmul %69, %2, %cst_43 {dimension_numbers = #tpu.dot_dimension_numbers<[1], [0], [0], [1], [0, 0, 1, 1], [], []>} : vector<8x16xf32>, vector<16x16xf32>, vector<8x16xf32> -> vector<8x16xf32>
    %78 = arith.addf %76, %77 : vector<8x16xf32>
    %79 = math.tanh %78 : vector<8x16xf32>
    %cst_44 = arith.constant dense<0.000000e+00> : vector<8x16xf32>
    %80 = tpu.matmul %79, %3, %cst_44 {dimension_numbers = #tpu.dot_dimension_numbers<[1], [0], [0], [1], [0, 0, 1, 1], [], []>} : vector<8x16xf32>, vector<16x16xf32>, vector<8x16xf32> -> vector<8x16xf32>
    %81 = arith.addf %80, %75 : vector<8x16xf32>
    %82 = math.tanh %81 : vector<8x16xf32>
    %c0_45 = arith.constant 0 : index
    %c96 = arith.constant 96 : index
    %83 = vector.load %arg14[%c0_45, %c96] : memref<8x128xf32, #tpu.memory_space<vmem>>, vector<8x16xf32>
    tpu.vector_store %arg14[%c0_45, %c96], %82 {strides = array<i32>} : memref<8x128xf32, #tpu.memory_space<vmem>>, vector<8x16xf32>,
    %cst_46 = arith.constant dense<0.000000e+00> : vector<8x16xf32>
    %84 = tpu.matmul %82, %4, %cst_46 {dimension_numbers = #tpu.dot_dimension_numbers<[1], [0], [0], [1], [0, 0, 1, 1], [], []>} : vector<8x16xf32>, vector<16x16xf32>, vector<8x16xf32> -> vector<8x16xf32>
    %85 = arith.addf %84, %13 : vector<8x16xf32>
    %86 = vector.extract_strided_slice %10 {offsets = [0, 112], sizes = [8, 16], strides = [1, 1]} : vector<8x128xf32> to vector<8x16xf32>
    %cst_47 = arith.constant dense<0.000000e+00> : vector<8x16xf32>
    %87 = tpu.matmul %79, %2, %cst_47 {dimension_numbers = #tpu.dot_dimension_numbers<[1], [0], [0], [1], [0, 0, 1, 1], [], []>} : vector<8x16xf32>, vector<16x16xf32>, vector<8x16xf32> -> vector<8x16xf32>
    %88 = arith.addf %86, %87 : vector<8x16xf32>
    %89 = math.tanh %88 : vector<8x16xf32>
    %cst_48 = arith.constant dense<0.000000e+00> : vector<8x16xf32>
    %90 = tpu.matmul %89, %3, %cst_48 {dimension_numbers = #tpu.dot_dimension_numbers<[1], [0], [0], [1], [0, 0, 1, 1], [], []>} : vector<8x16xf32>, vector<16x16xf32>, vector<8x16xf32> -> vector<8x16xf32>
    %91 = arith.addf %90, %85 : vector<8x16xf32>
    %92 = math.tanh %91 : vector<8x16xf32>
    %c0_49 = arith.constant 0 : index
    %c112 = arith.constant 112 : index
    %93 = vector.load %arg14[%c0_49, %c112] : memref<8x128xf32, #tpu.memory_space<vmem>>, vector<8x16xf32>
    tpu.vector_store %arg14[%c0_49, %c112], %92 {strides = array<i32>} : memref<8x128xf32, #tpu.memory_space<vmem>>, vector<8x16xf32>,
    %c0_50 = arith.constant 0 : index
    %c0_51 = arith.constant 0 : index
    %94 = vector.load %arg14[%c0_50, %c0_51] : memref<8x128xf32, #tpu.memory_space<vmem>>, vector<8x128xf32>
    %c0_52 = arith.constant 0 : index
    %c0_53 = arith.constant 0 : index
    %95 = vector.load %arg9[%c0_52, %c0_53] : memref<128x8xf32, #tpu.memory_space<vmem>>, vector<128x8xf32>
    %cst_54 = arith.constant dense<0.000000e+00> : vector<8x8xf32>
    %96 = tpu.matmul %94, %95, %cst_54 {dimension_numbers = #tpu.dot_dimension_numbers<[1], [0], [0], [1], [0, 0, 1, 1], [], []>} : vector<8x128xf32>, vector<128x8xf32>, vector<8x8xf32> -> vector<8x8xf32>
    %c0_55 = arith.constant 0 : index
    %c0_56 = arith.constant 0 : index
    %97 = vector.load %arg10[%c0_55, %c0_56] : memref<1x1xf32, #tpu.memory_space<vmem>>, vector<1x1xf32>
    %98 = vector.broadcast %97 : vector<1x1xf32> to vector<8x8xf32>
    %99 = arith.addf %96, %98 : vector<8x8xf32>
    %c0_57 = arith.constant 0 : index
    %c0_58 = arith.constant 0 : index
    %100 = vector.load %arg11[%c0_57, %c0_58] : memref<8x8xf32, #tpu.memory_space<vmem>>, vector<8x8xf32>
    tpu.vector_store %arg11[%c0_57, %c0_58], %99 {strides = array<i32>} : memref<8x8xf32, #tpu.memory_space<vmem>>, vector<8x8xf32>,
    %c0_59 = arith.constant 0 : index
    %c0_60 = arith.constant 0 : index
    %101 = vector.load %arg12[%c0_59, %c0_60] : memref<8x16xf32, #tpu.memory_space<vmem>>, vector<8x16xf32>
    tpu.vector_store %arg12[%c0_59, %c0_60], %89 {strides = array<i32>} : memref<8x16xf32, #tpu.memory_space<vmem>>, vector<8x16xf32>,
    %c0_61 = arith.constant 0 : index
    %c0_62 = arith.constant 0 : index
    %102 = vector.load %arg13[%c0_61, %c0_62] : memref<8x16xf32, #tpu.memory_space<vmem>>, vector<8x16xf32>
    tpu.vector_store %arg13[%c0_61, %c0_62], %92 {strides = array<i32>} : memref<8x16xf32, #tpu.memory_space<vmem>>, vector<8x16xf32>,
    return
  }
}

</mosaic_0001>

<llo_original>
// kernel: tpu_custom_call.1
$region0: #{tpu_custom_call.1}
  #allocation0 [shape = 'u32[]', space=smem, size = 0x4, offset = 0x4, fixed_abs, tag = 'smem constant byte address 0x4 - core index']
  #allocation1 [shape = 'u32[144,128]{1,0:T(1,128)}', space=vmem, size = 0x12000, scoped, tag = 'internal scratch']
  #allocation2 [shape = 'f32[8,128]{1,0:T(8,128)}', space=vmem, size = 0x1000, scoped, tag = 'scratch operand']
  #allocation3 [shape = 'f32[1,1]{1,0:T(1,128)S(1)}', space=vmem, size = 0x200, scoped, tag = 'scoped memory for tpu_custom_call.1']
  %s0 = inlined_call_operand.vmem [shape: f32[8,39], index: 0, kind: input, shape index: {}]
  %s1 = inlined_call_operand.vmem [shape: f32[8,16], index: 1, kind: input, shape index: {}]
  %s2 = inlined_call_operand.vmem [shape: f32[8,16], index: 2, kind: input, shape index: {}]
  %s3 = inlined_call_operand.vmem [shape: f32[39,128], index: 3, kind: input, shape index: {}]
  %s4 = inlined_call_operand.vmem [shape: f32[1,128], index: 4, kind: input, shape index: {}]
  %s5 = inlined_call_operand.vmem [shape: f32[16,16], index: 5, kind: input, shape index: {}]
  %s6 = inlined_call_operand.vmem [shape: f32[16,16], index: 6, kind: input, shape index: {}]
  %s7 = inlined_call_operand.vmem [shape: f32[16,16], index: 7, kind: input, shape index: {}]
  %s8 = inlined_call_operand.vmem [shape: f32[1,16], index: 8, kind: input, shape index: {}]
  %s9 = inlined_call_operand.vmem [shape: f32[128,8], index: 9, kind: input, shape index: {}]
  %s10 = inlined_call_operand.<no memory space> [shape: f32[1,1], index: 10, kind: input, shape index: {}]
  %s11 = inlined_call_operand.hbm [shape: f32[8,8], index: 11, kind: output, shape index: {0}]
  %s12 = inlined_call_operand.hbm [shape: f32[8,16], index: 12, kind: output, shape index: {1}]
  %s13 = inlined_call_operand.hbm [shape: f32[8,16], index: 13, kind: output, shape index: {2}]
  %14 = xla_tuple %s11, %s12, %s13
  %s15 = sld [smem:[#allocation0]]
  $region70: #{tpu_custom_call.1} parent=0
    _
  %s17 = ssub.s32 1, %s15
  %s18 = scalar_select 0, %s17, %s15
  %v19 = vstv %s10
  %20 = vst [vmem:[#allocation3] sm:$0x1] %v19
  $region1: #{tpu_custom_call.1} parent=0
    #allocation4 [shape = 'u8[4096]{0}', space=vmem, size = 0x1000, scoped, tag = 'output window, operand 0, single buffered']
    #allocation5 [shape = 's32[1]{0}', space=sflag, size = 0x4, scoped, tag = 'scoped memory for tpu_custom_call.1']
    #allocation6 [shape = 'u8[4096]{0}', space=vmem, size = 0x1000, scoped, tag = 'output window, operand 1, single buffered']
    #allocation7 [shape = 's32[1]{0}', space=sflag, size = 0x4, scoped, tag = 'scoped memory for tpu_custom_call.1']
    #allocation8 [shape = 'u8[4096]{0}', space=vmem, size = 0x1000, scoped, tag = 'output window, operand 2, single buffered']
    %21 = vsyncpa [#allocation5], 0
    %22 = vsyncpa [#allocation7], 0
    // Predicated region
    $region2: #{tpu_custom_call.1} parent=1 // pred_check
      _
    $region3: #{tpu_custom_call.1} parent=1 // pred_check_branch
      %24 = sbr.rel (0) target = $region5
    $region4: #{tpu_custom_call.1} parent=1 // pred_region
      _
    $region5: #{tpu_custom_call.1} parent=1 // pred_fallthru
      _
    // Predicated region
    $region6: #{tpu_custom_call.1} parent=1 // pred_check
      _
    $region7: #{tpu_custom_call.1} parent=1 // pred_check_branch
      %26 = sbr.rel (0) target = $region9
    $region8: #{tpu_custom_call.1} parent=1 // pred_region
      _
    $region9: #{tpu_custom_call.1} parent=1 // pred_fallthru
      _
    // Predicated region
    $region10: #{tpu_custom_call.1} parent=1 // pred_check
      _
    $region11: #{tpu_custom_call.1} parent=1 // pred_check_branch
      %28 = sbr.rel (0) target = $region13
    $region12: #{tpu_custom_call.1} parent=1 // pred_region
      _
    $region13: #{tpu_custom_call.1} parent=1 // pred_fallthru
      _
    // Predicated region
    $region14: #{tpu_custom_call.1} parent=1 // pred_check
      _
    $region15: #{tpu_custom_call.1} parent=1 // pred_check_branch
      %30 = sbr.rel (0) target = $region17
    $region16: #{tpu_custom_call.1} parent=1 // pred_region
      _
    $region17: #{tpu_custom_call.1} parent=1 // pred_fallthru
      _
    // Predicated region
    $region18: #{tpu_custom_call.1} parent=1 // pred_check
      _
    $region19: #{tpu_custom_call.1} parent=1 // pred_check_branch
      %32 = sbr.rel (0) target = $region21
    $region20: #{tpu_custom_call.1} parent=1 // pred_region
      _
    $region21: #{tpu_custom_call.1} parent=1 // pred_fallthru
      _
    // Predicated region
    $region22: #{tpu_custom_call.1} parent=1 // pred_check
      _
    $region23: #{tpu_custom_call.1} parent=1 // pred_check_branch
      %34 = sbr.rel (0) target = $region25
    $region24: #{tpu_custom_call.1} parent=1 // pred_region
      _
    $region25: #{tpu_custom_call.1} parent=1 // pred_fallthru
      _
    // Predicated region
    $region26: #{tpu_custom_call.1} parent=1 // pred_check
      _
    $region27: #{tpu_custom_call.1} parent=1 // pred_check_branch
      %36 = sbr.rel (0) target = $region29
    $region28: #{tpu_custom_call.1} parent=1 // pred_region
      _
    $region29: #{tpu_custom_call.1} parent=1 // pred_fallthru
      _
    // Predicated region
    $region30: #{tpu_custom_call.1} parent=1 // pred_check
      _
    $region31: #{tpu_custom_call.1} parent=1 // pred_check_branch
      %38 = sbr.rel (0) target = $region33
    $region32: #{tpu_custom_call.1} parent=1 // pred_region
      _
    $region33: #{tpu_custom_call.1} parent=1 // pred_fallthru
      _
    // Predicated region
    $region34: #{tpu_custom_call.1} parent=1 // pred_check
      _
    $region35: #{tpu_custom_call.1} parent=1 // pred_check_branch
      %40 = sbr.rel (0) target = $region37
    $region36: #{tpu_custom_call.1} parent=1 // pred_region
      _
    $region37: #{tpu_custom_call.1} parent=1 // pred_fallthru
      _
    // Predicated region
    $region38: #{tpu_custom_call.1} parent=1 // pred_check
      _
    $region39: #{tpu_custom_call.1} parent=1 // pred_check_branch
      %42 = sbr.rel (0) target = $region41
    $region40: #{tpu_custom_call.1} parent=1 // pred_region
      _
    $region41: #{tpu_custom_call.1} parent=1 // pred_fallthru
      _
    // Predicated region
    $region42: #{tpu_custom_call.1} parent=1 // pred_check
      _
    $region43: #{tpu_custom_call.1} parent=1 // pred_check_branch
      %44 = sbr.rel (0) target = $region45
    $region44: #{tpu_custom_call.1} parent=1 // pred_region
      _
    $region45: #{tpu_custom_call.1} parent=1 // pred_fallthru
      _
    %v45 = vld [vmem:[%s1] sm:$0xff]
    %v46 = vld [vmem:[%s2] sm:$0xff]
    %v47 = vld [vmem:[%s5] sm:$0xff]
    %v48 = vld [vmem:[%s5 + $0x8] sm:$0xff]
    %v49 = vld [vmem:[%s6] sm:$0xff]
    %v50 = vld [vmem:[%s6 + $0x8] sm:$0xff]
    %v51 = vld [vmem:[%s7] sm:$0xff]
    %v52 = vld [vmem:[%s7 + $0x8] sm:$0xff]
    %v53 = vld [vmem:[%s0] sm:$0xff]
    %v54 = vld [vmem:[%s3] sm:$0xff]
    %v55 = vld [vmem:[%s3 + $0x8] sm:$0xff]
    %v56 = vld [vmem:[%s3 + $0x10] sm:$0xff]
    %v57 = vld [vmem:[%s3 + $0x18] sm:$0xff]
    %v58 = vld [vmem:[%s3 + $0x20] sm:$0x7f]
    %v59 = vld [vmem:[%s4] sm:$0x1]
    %v61 = vlaneseq
    %v62 = vshrl.u32 %v61, 7
    %v63 = vsub.s32 0, %v62
    %v64 = vrot.slane %v59, %v63
    %vm66 = vcmask 318464
    %v68 = vsel %vm66, %v53, 0
    %vm70 = vcmask 1046528
    %v72 = vsel %vm70, %v58, 0
    %74 = vmatprep.subr.mxu0 0.0
    %75 = vmatpush1.msra.mxu0 0.0
    %76 = vmatprep.subr.mxu0 0.0
    %77 = vmatpush1.msra.mxu0 0.0
    %78 = vmatprep.subr.mxu0 0.0
    %79 = vmatpush1.msra.mxu0 0.0
    %80 = vmatprep.subr.mxu0 0.0
    %81 = vmatpush1.msra.mxu0 0.0
    %82 = vmatprep.subr.mxu0 0.0
    %83 = vmatpush1.msra.mxu0 0.0
    %84 = vmatprep.subr.mxu0 0.0
    %85 = vmatpush1.msra.mxu0 0.0
    %86 = vmatprep.subr.mxu0 0.0
    %87 = vmatpush1.msra.mxu0 0.0
    %88 = vmatprep.subr.mxu0 0.0
    %89 = vmatpush1.msra.mxu0 0.0
    %90 = vmatprep.subr.mxu0 0.0
    %91 = vmatpush1.msra.mxu0 0.0
    %92 = vmatprep.subr.mxu0 0.0
    %93 = vmatpush1.msra.mxu0 0.0
    %94 = vmatprep.subr.mxu0 0.0
    %95 = vmatpush1.msra.mxu0 0.0
    %96 = vmatprep.subr.mxu0 0.0
    %97 = vmatpush1.msra.mxu0 %v72
    %98 = vmatprep.subr.mxu0 0.0
    %99 = vmatpush1.msra.mxu0 %v57
    %100 = vmatprep.subr.mxu0 0.0
    %101 = vmatpush1.msra.mxu0 %v56
    %102 = vmatprep.subr.mxu0 0.0
    %103 = vmatpush1.msra.mxu0 %v55
    %104 = vmatprep.subr.mxu0 0.0
    %105 = vmatpush1.msra.mxu0 %v54
    %106 = vmatprep.subr.mxu0 0.0
    %107 = vmatpush2.msra.mxu0 0.0
    %108 = vmatprep.subr.mxu0 0.0
    %109 = vmatpush2.msra.mxu0 0.0
    %110 = vmatprep.subr.mxu0 0.0
    %111 = vmatpush2.msra.mxu0 0.0
    %112 = vmatprep.subr.mxu0 0.0
    %113 = vmatpush2.msra.mxu0 0.0
    %114 = vmatprep.subr.mxu0 0.0
    %115 = vmatpush2.msra.mxu0 0.0
    %116 = vmatprep.subr.mxu0 0.0
    %117 = vmatpush2.msra.mxu0 0.0
    %118 = vmatprep.subr.mxu0 0.0
    %119 = vmatpush2.msra.mxu0 0.0
    %120 = vmatprep.subr.mxu0 0.0
    %121 = vmatpush2.msra.mxu0 0.0
    %122 = vmatprep.subr.mxu0 0.0
    %123 = vmatpush2.msra.mxu0 0.0
    %124 = vmatprep.subr.mxu0 0.0
    %125 = vmatpush2.msra.mxu0 0.0
    %126 = vmatprep.subr.mxu0 0.0
    %127 = vmatpush2.msra.mxu0 0.0
    %128 = vmatprep.subr.mxu0 0.0
    %129 = vmatpush2.msra.mxu0 0.0
    %130 = vmatprep.subr.mxu0 0.0
    %131 = vmatpush2.msra.mxu0 0.0
    %132 = vmatprep.subr.mxu0 0.0
    %133 = vmatpush2.msra.mxu0 0.0
    %134 = vmatprep.subr.mxu0 0.0
    %135 = vmatpush2.msra.mxu0 0.0
    %136 = vmatprep.subr.mxu0 0.0
    %137 = vmatpush2.msra.mxu0 0.0
    %138 = vmatprep.mubr.f32.mxu0 0.0
    %139 = vmatmul.mubr.f32.gmra.mxu0 %v68
    %v140 = vpop.f32.mrf.mxu0
    %v141 = vadd.f32 %v64, %v140
    %v142 = vpop.f32.mrf.mxu0
    %143 = vdwg.mxu0
    %v144 = vld [vmem:[%s8] sm:$0x1]
    %v146 = vlaneseq
    %v147 = vshrl.u32 %v146, 7
    %v148 = vsub.s32 0, %v147
    %v149 = vrot.slane %v144, %v148
    %vm151 = vcmask 130048
    %v153 = vsel %vm151, %v46, 0
    %155 = vmatprep.subr.mxu0 0.0
    %156 = vmatpush1.msra.mxu0 0.0
    %157 = vmatprep.subr.mxu0 0.0
    %158 = vmatpush1.msra.mxu0 0.0
    %159 = vmatprep.subr.mxu0 0.0
    %160 = vmatpush1.msra.mxu0 0.0
    %161 = vmatprep.subr.mxu0 0.0
    %162 = vmatpush1.msra.mxu0 0.0
    %163 = vmatprep.subr.mxu0 0.0
    %164 = vmatpush1.msra.mxu0 0.0
    %165 = vmatprep.subr.mxu0 0.0
    %166 = vmatpush1.msra.mxu0 0.0
    %167 = vmatprep.subr.mxu0 0.0
    %168 = vmatpush1.msra.mxu0 0.0
    %169 = vmatprep.subr.mxu0 0.0
    %170 = vmatpush1.msra.mxu0 0.0
    %171 = vmatprep.subr.mxu0 0.0
    %172 = vmatpush1.msra.mxu0 0.0
    %173 = vmatprep.subr.mxu0 0.0
    %174 = vmatpush1.msra.mxu0 0.0
    %175 = vmatprep.subr.mxu0 0.0
    %176 = vmatpush1.msra.mxu0 0.0
    %177 = vmatprep.subr.mxu0 0.0
    %178 = vmatpush1.msra.mxu0 0.0
    %179 = vmatprep.subr.mxu0 0.0
    %180 = vmatpush1.msra.mxu0 0.0
    %181 = vmatprep.subr.mxu0 0.0
    %182 = vmatpush1.msra.mxu0 0.0
    %183 = vmatprep.subr.mxu0 0.0
    %184 = vmatpush1.msra.mxu0 %v52
    %185 = vmatprep.subr.mxu0 0.0
    %186 = vmatpush1.msra.mxu0 %v51
    %187 = vmatprep.subr.mxu0 0.0
    %188 = vmatpush2.msra.mxu0 0.0
    %189 = vmatprep.subr.mxu0 0.0
    %190 = vmatpush2.msra.mxu0 0.0
    %191 = vmatprep.subr.mxu0 0.0
    %192 = vmatpush2.msra.mxu0 0.0
    %193 = vmatprep.subr.mxu0 0.0
    %194 = vmatpush2.msra.mxu0 0.0
    %195 = vmatprep.subr.mxu0 0.0
    %196 = vmatpush2.msra.mxu0 0.0
    %197 = vmatprep.subr.mxu0 0.0
    %198 = vmatpush2.msra.mxu0 0.0
    %199 = vmatprep.subr.mxu0 0.0
    %200 = vmatpush2.msra.mxu0 0.0
    %201 = vmatprep.subr.mxu0 0.0
    %202 = vmatpush2.msra.mxu0 0.0
    %203 = vmatprep.subr.mxu0 0.0
    %204 = vmatpush2.msra.mxu0 0.0
    %205 = vmatprep.subr.mxu0 0.0
    %206 = vmatpush2.msra.mxu0 0.0
    %207 = vmatprep.subr.mxu0 0.0
    %208 = vmatpush2.msra.mxu0 0.0
    %209 = vmatprep.subr.mxu0 0.0
    %210 = vmatpush2.msra.mxu0 0.0
    %211 = vmatprep.subr.mxu0 0.0
    %212 = vmatpush2.msra.mxu0 0.0
    %213 = vmatprep.subr.mxu0 0.0
    %214 = vmatpush2.msra.mxu0 0.0
    %215 = vmatprep.subr.mxu0 0.0
    %216 = vmatpush2.msra.mxu0 0.0
    %217 = vmatprep.subr.mxu0 0.0
    %218 = vmatpush2.msra.mxu0 0.0
    %219 = vmatprep.mubr.f32.mxu0 0.0
    %220 = vmatmul.mubr.f32.gmra.mxu0 %v153
    %v221 = vpop.f32.mrf.mxu0
    %v222 = vadd.f32 %v149, %v221
    %v223 = vpop.f32.mrf.mxu0
    %224 = vdwg.mxu0
    %v226 = vsel %vm151, %v45, 0
    %228 = vmatprep.subr.mxu0 0.0
    %229 = vmatpush1.msra.mxu0 0.0
    %230 = vmatprep.subr.mxu0 0.0
    %231 = vmatpush1.msra.mxu0 0.0
    %232 = vmatprep.subr.mxu0 0.0
    %233 = vmatpush1.msra.mxu0 0.0
    %234 = vmatprep.subr.mxu0 0.0
    %235 = vmatpush1.msra.mxu0 0.0
    %236 = vmatprep.subr.mxu0 0.0
    %237 = vmatpush1.msra.mxu0 0.0
    %238 = vmatprep.subr.mxu0 0.0
    %239 = vmatpush1.msra.mxu0 0.0
    %240 = vmatprep.subr.mxu0 0.0
    %241 = vmatpush1.msra.mxu0 0.0
    %242 = vmatprep.subr.mxu0 0.0
    %243 = vmatpush1.msra.mxu0 0.0
    %244 = vmatprep.subr.mxu0 0.0
    %245 = vmatpush1.msra.mxu0 0.0
    %246 = vmatprep.subr.mxu0 0.0
    %247 = vmatpush1.msra.mxu0 0.0
    %248 = vmatprep.subr.mxu0 0.0
    %249 = vmatpush1.msra.mxu0 0.0
    %250 = vmatprep.subr.mxu0 0.0
    %251 = vmatpush1.msra.mxu0 0.0
    %252 = vmatprep.subr.mxu0 0.0
    %253 = vmatpush1.msra.mxu0 0.0
    %254 = vmatprep.subr.mxu0 0.0
    %255 = vmatpush1.msra.mxu0 0.0
    %256 = vmatprep.subr.mxu0 0.0
    %257 = vmatpush1.msra.mxu0 %v48
    %258 = vmatprep.subr.mxu0 0.0
    %259 = vmatpush1.msra.mxu0 %v47
    %260 = vmatprep.subr.mxu0 0.0
    %261 = vmatpush2.msra.mxu0 0.0
    %262 = vmatprep.subr.mxu0 0.0
    %263 = vmatpush2.msra.mxu0 0.0
    %264 = vmatprep.subr.mxu0 0.0
    %265 = vmatpush2.msra.mxu0 0.0
    %266 = vmatprep.subr.mxu0 0.0
    %267 = vmatpush2.msra.mxu0 0.0
    %268 = vmatprep.subr.mxu0 0.0
    %269 = vmatpush2.msra.mxu0 0.0
    %270 = vmatprep.subr.mxu0 0.0
    %271 = vmatpush2.msra.mxu0 0.0
    %272 = vmatprep.subr.mxu0 0.0
    %273 = vmatpush2.msra.mxu0 0.0
    %274 = vmatprep.subr.mxu0 0.0
    %275 = vmatpush2.msra.mxu0 0.0
    %276 = vmatprep.subr.mxu0 0.0
    %277 = vmatpush2.msra.mxu0 0.0
    %278 = vmatprep.subr.mxu0 0.0
    %279 = vmatpush2.msra.mxu0 0.0
    %280 = vmatprep.subr.mxu0 0.0
    %281 = vmatpush2.msra.mxu0 0.0
    %282 = vmatprep.subr.mxu0 0.0
    %283 = vmatpush2.msra.mxu0 0.0
    %284 = vmatprep.subr.mxu0 0.0
    %285 = vmatpush2.msra.mxu0 0.0
    %286 = vmatprep.subr.mxu0 0.0
    %287 = vmatpush2.msra.mxu0 0.0
    %288 = vmatprep.subr.mxu0 0.0
    %289 = vmatpush2.msra.mxu0 0.0
    %290 = vmatprep.subr.mxu0 0.0
    %291 = vmatpush2.msra.mxu0 0.0
    %292 = vmatprep.mubr.f32.mxu0 0.0
    %293 = vmatmul.mubr.f32.gmra.mxu0 %v226
    %v294 = vpop.f32.mrf.mxu0
    %v295 = vadd.f32 0.0, %v294
    %v296 = vpop.f32.mrf.mxu0
    %297 = vdwg.mxu0
    %v298 = vadd.f32 %v141, %v295
    %v299 = vtanh.pop %v298
    %v301 = vsel %vm151, %v299, 0
    %303 = vmatprep.subr.mxu0 0.0
    %304 = vmatpush1.msra.mxu0 0.0
    %305 = vmatprep.subr.mxu0 0.0
    %306 = vmatpush1.msra.mxu0 0.0
    %307 = vmatprep.subr.mxu0 0.0
    %308 = vmatpush1.msra.mxu0 0.0
    %309 = vmatprep.subr.mxu0 0.0
    %310 = vmatpush1.msra.mxu0 0.0
    %311 = vmatprep.subr.mxu0 0.0
    %312 = vmatpush1.msra.mxu0 0.0
    %313 = vmatprep.subr.mxu0 0.0
    %314 = vmatpush1.msra.mxu0 0.0
    %315 = vmatprep.subr.mxu0 0.0
    %316 = vmatpush1.msra.mxu0 0.0
    %317 = vmatprep.subr.mxu0 0.0
    %318 = vmatpush1.msra.mxu0 0.0
    %319 = vmatprep.subr.mxu0 0.0
    %320 = vmatpush1.msra.mxu0 0.0
    %321 = vmatprep.subr.mxu0 0.0
    %322 = vmatpush1.msra.mxu0 0.0
    %323 = vmatprep.subr.mxu0 0.0
    %324 = vmatpush1.msra.mxu0 0.0
    %325 = vmatprep.subr.mxu0 0.0
    %326 = vmatpush1.msra.mxu0 0.0
    %327 = vmatprep.subr.mxu0 0.0
    %328 = vmatpush1.msra.mxu0 0.0
    %329 = vmatprep.subr.mxu0 0.0
    %330 = vmatpush1.msra.mxu0 0.0
    %331 = vmatprep.subr.mxu0 0.0
    %332 = vmatpush1.msra.mxu0 %v50
    %333 = vmatprep.subr.mxu0 0.0
    %334 = vmatpush1.msra.mxu0 %v49
    %335 = vmatprep.subr.mxu0 0.0
    %336 = vmatpush2.msra.mxu0 0.0
    %337 = vmatprep.subr.mxu0 0.0
    %338 = vmatpush2.msra.mxu0 0.0
    %339 = vmatprep.subr.mxu0 0.0
    %340 = vmatpush2.msra.mxu0 0.0
    %341 = vmatprep.subr.mxu0 0.0
    %342 = vmatpush2.msra.mxu0 0.0
    %343 = vmatprep.subr.mxu0 0.0
    %344 = vmatpush2.msra.mxu0 0.0
    %345 = vmatprep.subr.mxu0 0.0
    %346 = vmatpush2.msra.mxu0 0.0
    %347 = vmatprep.subr.mxu0 0.0
    %348 = vmatpush2.msra.mxu0 0.0
    %349 = vmatprep.subr.mxu0 0.0
    %350 = vmatpush2.msra.mxu0 0.0
    %351 = vmatprep.subr.mxu0 0.0
    %352 = vmatpush2.msra.mxu0 0.0
    %353 = vmatprep.subr.mxu0 0.0
    %354 = vmatpush2.msra.mxu0 0.0
    %355 = vmatprep.subr.mxu0 0.0
    %356 = vmatpush2.msra.mxu0 0.0
    %357 = vmatprep.subr.mxu0 0.0
    %358 = vmatpush2.msra.mxu0 0.0
    %359 = vmatprep.subr.mxu0 0.0
    %360 = vmatpush2.msra.mxu0 0.0
    %361 = vmatprep.subr.mxu0 0.0
    %362 = vmatpush2.msra.mxu0 0.0
    %363 = vmatprep.subr.mxu0 0.0
    %364 = vmatpush2.msra.mxu0 0.0
    %365 = vmatprep.subr.mxu0 0.0
    %366 = vmatpush2.msra.mxu0 0.0
    %367 = vmatprep.mubr.f32.mxu0 0.0
    %368 = vmatmul.mubr.f32.gmra.mxu0 %v301
    %v369 = vpop.f32.mrf.mxu0
    %v370 = vadd.f32 %v222, %v369
    %v371 = vpop.f32.mrf.mxu0
    %372 = vdwg.mxu0
    %v373 = vtanh.pop %v370
    %374 = vst.msk [vmem:[#allocation2] sm:$0xff] %vm151, %v373
    %v376 = vsel %vm151, %v373, 0
    %378 = vmatprep.subr.mxu0 0.0
    %379 = vmatpush1.msra.mxu0 0.0
    %380 = vmatprep.subr.mxu0 0.0
    %381 = vmatpush1.msra.mxu0 0.0
    %382 = vmatprep.subr.mxu0 0.0
    %383 = vmatpush1.msra.mxu0 0.0
    %384 = vmatprep.subr.mxu0 0.0
    %385 = vmatpush1.msra.mxu0 0.0
    %386 = vmatprep.subr.mxu0 0.0
    %387 = vmatpush1.msra.mxu0 0.0
    %388 = vmatprep.subr.mxu0 0.0
    %389 = vmatpush1.msra.mxu0 0.0
    %390 = vmatprep.subr.mxu0 0.0
    %391 = vmatpush1.msra.mxu0 0.0
    %392 = vmatprep.subr.mxu0 0.0
    %393 = vmatpush1.msra.mxu0 0.0
    %394 = vmatprep.subr.mxu0 0.0
    %395 = vmatpush1.msra.mxu0 0.0
    %396 = vmatprep.subr.mxu0 0.0
    %397 = vmatpush1.msra.mxu0 0.0
    %398 = vmatprep.subr.mxu0 0.0
    %399 = vmatpush1.msra.mxu0 0.0
    %400 = vmatprep.subr.mxu0 0.0
    %401 = vmatpush1.msra.mxu0 0.0
    %402 = vmatprep.subr.mxu0 0.0
    %403 = vmatpush1.msra.mxu0 0.0
    %404 = vmatprep.subr.mxu0 0.0
    %405 = vmatpush1.msra.mxu0 0.0
    %406 = vmatprep.subr.mxu0 0.0
    %407 = vmatpush1.msra.mxu0 %v52
    %408 = vmatprep.subr.mxu0 0.0
    %409 = vmatpush1.msra.mxu0 %v51
    %410 = vmatprep.subr.mxu0 0.0
    %411 = vmatpush2.msra.mxu0 0.0
    %412 = vmatprep.subr.mxu0 0.0
    %413 = vmatpush2.msra.mxu0 0.0
    %414 = vmatprep.subr.mxu0 0.0
    %415 = vmatpush2.msra.mxu0 0.0
    %416 = vmatprep.subr.mxu0 0.0
    %417 = vmatpush2.msra.mxu0 0.0
    %418 = vmatprep.subr.mxu0 0.0
    %419 = vmatpush2.msra.mxu0 0.0
    %420 = vmatprep.subr.mxu0 0.0
    %421 = vmatpush2.msra.mxu0 0.0
    %422 = vmatprep.subr.mxu0 0.0
    %423 = vmatpush2.msra.mxu0 0.0
    %424 = vmatprep.subr.mxu0 0.0
    %425 = vmatpush2.msra.mxu0 0.0
    %426 = vmatprep.subr.mxu0 0.0
    %427 = vmatpush2.msra.mxu0 0.0
    %428 = vmatprep.subr.mxu0 0.0
    %429 = vmatpush2.msra.mxu0 0.0
    %430 = vmatprep.subr.mxu0 0.0
    %431 = vmatpush2.msra.mxu0 0.0
    %432 = vmatprep.subr.mxu0 0.0
    %433 = vmatpush2.msra.mxu0 0.0
    %434 = vmatprep.subr.mxu0 0.0
    %435 = vmatpush2.msra.mxu0 0.0
    %436 = vmatprep.subr.mxu0 0.0
    %437 = vmatpush2.msra.mxu0 0.0
    %438 = vmatprep.subr.mxu0 0.0
    %439 = vmatpush2.msra.mxu0 0.0
    %440 = vmatprep.subr.mxu0 0.0
    %441 = vmatpush2.msra.mxu0 0.0
    %442 = vmatprep.mubr.f32.mxu0 0.0
    %443 = vmatmul.mubr.f32.gmra.mxu0 %v376
    %v444 = vpop.f32.mrf.mxu0
    %v445 = vadd.f32 %v149, %v444
    %v446 = vpop.f32.mrf.mxu0
    %447 = vdwg.mxu0
    %448 = vmatprep.subr.mxu0 0.0
    %449 = vmatpush1.msra.mxu0 0.0
    %450 = vmatprep.subr.mxu0 0.0
    %451 = vmatpush1.msra.mxu0 0.0
    %452 = vmatprep.subr.mxu0 0.0
    %453 = vmatpush1.msra.mxu0 0.0
    %454 = vmatprep.subr.mxu0 0.0
    %455 = vmatpush1.msra.mxu0 0.0
    %456 = vmatprep.subr.mxu0 0.0
    %457 = vmatpush1.msra.mxu0 0.0
    %458 = vmatprep.subr.mxu0 0.0
    %459 = vmatpush1.msra.mxu0 0.0
    %460 = vmatprep.subr.mxu0 0.0
    %461 = vmatpush1.msra.mxu0 0.0
    %462 = vmatprep.subr.mxu0 0.0
    %463 = vmatpush1.msra.mxu0 0.0
    %464 = vmatprep.subr.mxu0 0.0
    %465 = vmatpush1.msra.mxu0 0.0
    %466 = vmatprep.subr.mxu0 0.0
    %467 = vmatpush1.msra.mxu0 0.0
    %468 = vmatprep.subr.mxu0 0.0
    %469 = vmatpush1.msra.mxu0 0.0
    %470 = vmatprep.subr.mxu0 0.0
    %471 = vmatpush1.msra.mxu0 0.0
    %472 = vmatprep.subr.mxu0 0.0
    %473 = vmatpush1.msra.mxu0 0.0
    %474 = vmatprep.subr.mxu0 0.0
    %475 = vmatpush1.msra.mxu0 0.0
    %476 = vmatprep.subr.mxu0 0.0
    %477 = vmatpush1.msra.mxu0 %v48
    %478 = vmatprep.subr.mxu0 0.0
    %479 = vmatpush1.msra.mxu0 %v47
    %480 = vmatprep.subr.mxu0 0.0
    %481 = vmatpush2.msra.mxu0 0.0
    %482 = vmatprep.subr.mxu0 0.0
    %483 = vmatpush2.msra.mxu0 0.0
    %484 = vmatprep.subr.mxu0 0.0
    %485 = vmatpush2.msra.mxu0 0.0
    %486 = vmatprep.subr.mxu0 0.0
    %487 = vmatpush2.msra.mxu0 0.0
    %488 = vmatprep.subr.mxu0 0.0
    %489 = vmatpush2.msra.mxu0 0.0
    %490 = vmatprep.subr.mxu0 0.0
    %491 = vmatpush2.msra.mxu0 0.0
    %492 = vmatprep.subr.mxu0 0.0
    %493 = vmatpush2.msra.mxu0 0.0
    %494 = vmatprep.subr.mxu0 0.0
    %495 = vmatpush2.msra.mxu0 0.0
    %496 = vmatprep.subr.mxu0 0.0
    %497 = vmatpush2.msra.mxu0 0.0
    %498 = vmatprep.subr.mxu0 0.0
    %499 = vmatpush2.msra.mxu0 0.0
    %500 = vmatprep.subr.mxu0 0.0
    %501 = vmatpush2.msra.mxu0 0.0
    %502 = vmatprep.subr.mxu0 0.0
    %503 = vmatpush2.msra.mxu0 0.0
    %504 = vmatprep.subr.mxu0 0.0
    %505 = vmatpush2.msra.mxu0 0.0
    %506 = vmatprep.subr.mxu0 0.0
    %507 = vmatpush2.msra.mxu0 0.0
    %508 = vmatprep.subr.mxu0 0.0
    %509 = vmatpush2.msra.mxu0 0.0
    %510 = vmatprep.subr.mxu0 0.0
    %511 = vmatpush2.msra.mxu0 0.0
    %512 = vmatprep.mubr.f32.mxu0 0.0
    %513 = vmatmul.mubr.f32.gmra.mxu0 %v301
    %v514 = vpop.f32.mrf.mxu0
    %v515 = vadd.f32 0.0, %v514
    %v516 = vpop.f32.mrf.mxu0
    %517 = vdwg.mxu0
    %519 = vrot.lane.b32.xlu0 %v515, 16
    %v520 = vpop.permute.xlu0 %519
    %v522 = vadd.f32 %v141, %v520
    %v523 = vtanh.pop %v522
    %525 = vrot.lane.b32.xlu0 %v523, 112
    %v526 = vpop.permute.xlu0 %525
    %v527 = vsel %vm151, %v526, 0
    %529 = vmatprep.subr.mxu0 0.0
    %530 = vmatpush1.msra.mxu0 0.0
    %531 = vmatprep.subr.mxu0 0.0
    %532 = vmatpush1.msra.mxu0 0.0
    %533 = vmatprep.subr.mxu0 0.0
    %534 = vmatpush1.msra.mxu0 0.0
    %535 = vmatprep.subr.mxu0 0.0
    %536 = vmatpush1.msra.mxu0 0.0
    %537 = vmatprep.subr.mxu0 0.0
    %538 = vmatpush1.msra.mxu0 0.0
    %539 = vmatprep.subr.mxu0 0.0
    %540 = vmatpush1.msra.mxu0 0.0
    %541 = vmatprep.subr.mxu0 0.0
    %542 = vmatpush1.msra.mxu0 0.0
    %543 = vmatprep.subr.mxu0 0.0
    %544 = vmatpush1.msra.mxu0 0.0
    %545 = vmatprep.subr.mxu0 0.0
    %546 = vmatpush1.msra.mxu0 0.0
    %547 = vmatprep.subr.mxu0 0.0
    %548 = vmatpush1.msra.mxu0 0.0
    %549 = vmatprep.subr.mxu0 0.0
    %550 = vmatpush1.msra.mxu0 0.0
    %551 = vmatprep.subr.mxu0 0.0
    %552 = vmatpush1.msra.mxu0 0.0
    %553 = vmatprep.subr.mxu0 0.0
    %554 = vmatpush1.msra.mxu0 0.0
    %555 = vmatprep.subr.mxu0 0.0
    %556 = vmatpush1.msra.mxu0 0.0
    %557 = vmatprep.subr.mxu0 0.0
    %558 = vmatpush1.msra.mxu0 %v50
    %559 = vmatprep.subr.mxu0 0.0
    %560 = vmatpush1.msra.mxu0 %v49
    %561 = vmatprep.subr.mxu0 0.0
    %562 = vmatpush2.msra.mxu0 0.0
    %563 = vmatprep.subr.mxu0 0.0
    %564 = vmatpush2.msra.mxu0 0.0
    %565 = vmatprep.subr.mxu0 0.0
    %566 = vmatpush2.msra.mxu0 0.0
    %567 = vmatprep.subr.mxu0 0.0
    %568 = vmatpush2.msra.mxu0 0.0
    %569 = vmatprep.subr.mxu0 0.0
    %570 = vmatpush2.msra.mxu0 0.0
    %571 = vmatprep.subr.mxu0 0.0
    %572 = vmatpush2.msra.mxu0 0.0
    %573 = vmatprep.subr.mxu0 0.0
    %574 = vmatpush2.msra.mxu0 0.0
    %575 = vmatprep.subr.mxu0 0.0
    %576 = vmatpush2.msra.mxu0 0.0
    %577 = vmatprep.subr.mxu0 0.0
    %578 = vmatpush2.msra.mxu0 0.0
    %579 = vmatprep.subr.mxu0 0.0
    %580 = vmatpush2.msra.mxu0 0.0
    %581 = vmatprep.subr.mxu0 0.0
    %582 = vmatpush2.msra.mxu0 0.0
    %583 = vmatprep.subr.mxu0 0.0
    %584 = vmatpush2.msra.mxu0 0.0
    %585 = vmatprep.subr.mxu0 0.0
    %586 = vmatpush2.msra.mxu0 0.0
    %587 = vmatprep.subr.mxu0 0.0
    %588 = vmatpush2.msra.mxu0 0.0
    %589 = vmatprep.subr.mxu0 0.0
    %590 = vmatpush2.msra.mxu0 0.0
    %591 = vmatprep.subr.mxu0 0.0
    %592 = vmatpush2.msra.mxu0 0.0
    %593 = vmatprep.mubr.f32.mxu0 0.0
    %594 = vmatmul.mubr.f32.gmra.mxu0 %v527
    %v595 = vpop.f32.mrf.mxu0
    %v596 = vadd.f32 %v445, %v595
    %v597 = vpop.f32.mrf.mxu0
    %598 = vdwg.mxu0
    %v599 = vtanh.pop %v596
    %601 = vrot.lane.b32.xlu0 %v599, 16
    %v602 = vpop.permute.xlu0 %601
    %vm604 = vcmask 261248
    %605 = vst.msk [vmem:[#allocation2] sm:$0xff] %vm604, %v602
    %v606 = vsel %vm151, %v599, 0
    %608 = vmatprep.subr.mxu0 0.0
    %609 = vmatpush1.msra.mxu0 0.0
    %610 = vmatprep.subr.mxu0 0.0
    %611 = vmatpush1.msra.mxu0 0.0
    %612 = vmatprep.subr.mxu0 0.0
    %613 = vmatpush1.msra.mxu0 0.0
    %614 = vmatprep.subr.mxu0 0.0
    %615 = vmatpush1.msra.mxu0 0.0
    %616 = vmatprep.subr.mxu0 0.0
    %617 = vmatpush1.msra.mxu0 0.0
    %618 = vmatprep.subr.mxu0 0.0
    %619 = vmatpush1.msra.mxu0 0.0
    %620 = vmatprep.subr.mxu0 0.0
    %621 = vmatpush1.msra.mxu0 0.0
    %622 = vmatprep.subr.mxu0 0.0
    %623 = vmatpush1.msra.mxu0 0.0
    %624 = vmatprep.subr.mxu0 0.0
    %625 = vmatpush1.msra.mxu0 0.0
    %626 = vmatprep.subr.mxu0 0.0
    %627 = vmatpush1.msra.mxu0 0.0
    %628 = vmatprep.subr.mxu0 0.0
    %629 = vmatpush1.msra.mxu0 0.0
    %630 = vmatprep.subr.mxu0 0.0
    %631 = vmatpush1.msra.mxu0 0.0
    %632 = vmatprep.subr.mxu0 0.0
    %633 = vmatpush1.msra.mxu0 0.0
    %634 = vmatprep.subr.mxu0 0.0
    %635 = vmatpush1.msra.mxu0 0.0
    %636 = vmatprep.subr.mxu0 0.0
    %637 = vmatpush1.msra.mxu0 %v52
    %638 = vmatprep.subr.mxu0 0.0
    %639 = vmatpush1.msra.mxu0 %v51
    %640 = vmatprep.subr.mxu0 0.0
    %641 = vmatpush2.msra.mxu0 0.0
    %642 = vmatprep.subr.mxu0 0.0
    %643 = vmatpush2.msra.mxu0 0.0
    %644 = vmatprep.subr.mxu0 0.0
    %645 = vmatpush2.msra.mxu0 0.0
    %646 = vmatprep.subr.mxu0 0.0
    %647 = vmatpush2.msra.mxu0 0.0
    %648 = vmatprep.subr.mxu0 0.0
    %649 = vmatpush2.msra.mxu0 0.0
    %650 = vmatprep.subr.mxu0 0.0
    %651 = vmatpush2.msra.mxu0 0.0
    %652 = vmatprep.subr.mxu0 0.0
    %653 = vmatpush2.msra.mxu0 0.0
    %654 = vmatprep.subr.mxu0 0.0
    %655 = vmatpush2.msra.mxu0 0.0
    %656 = vmatprep.subr.mxu0 0.0
    %657 = vmatpush2.msra.mxu0 0.0
    %658 = vmatprep.subr.mxu0 0.0
    %659 = vmatpush2.msra.mxu0 0.0
    %660 = vmatprep.subr.mxu0 0.0
    %661 = vmatpush2.msra.mxu0 0.0
    %662 = vmatprep.subr.mxu0 0.0
    %663 = vmatpush2.msra.mxu0 0.0
    %664 = vmatprep.subr.mxu0 0.0
    %665 = vmatpush2.msra.mxu0 0.0
    %666 = vmatprep.subr.mxu0 0.0
    %667 = vmatpush2.msra.mxu0 0.0
    %668 = vmatprep.subr.mxu0 0.0
    %669 = vmatpush2.msra.mxu0 0.0
    %670 = vmatprep.subr.mxu0 0.0
    %671 = vmatpush2.msra.mxu0 0.0
    %672 = vmatprep.mubr.f32.mxu0 0.0
    %673 = vmatmul.mubr.f32.gmra.mxu0 %v606
    %v674 = vpop.f32.mrf.mxu0
    %v675 = vadd.f32 %v149, %v674
    %v676 = vpop.f32.mrf.mxu0
    %677 = vdwg.mxu0
    %678 = vmatprep.subr.mxu0 0.0
    %679 = vmatpush1.msra.mxu0 0.0
    %680 = vmatprep.subr.mxu0 0.0
    %681 = vmatpush1.msra.mxu0 0.0
    %682 = vmatprep.subr.mxu0 0.0
    %683 = vmatpush1.msra.mxu0 0.0
    %684 = vmatprep.subr.mxu0 0.0
    %685 = vmatpush1.msra.mxu0 0.0
    %686 = vmatprep.subr.mxu0 0.0
    %687 = vmatpush1.msra.mxu0 0.0
    %688 = vmatprep.subr.mxu0 0.0
    %689 = vmatpush1.msra.mxu0 0.0
    %690 = vmatprep.subr.mxu0 0.0
    %691 = vmatpush1.msra.mxu0 0.0
    %692 = vmatprep.subr.mxu0 0.0
    %693 = vmatpush1.msra.mxu0 0.0
    %694 = vmatprep.subr.mxu0 0.0
    %695 = vmatpush1.msra.mxu0 0.0
    %696 = vmatprep.subr.mxu0 0.0
    %697 = vmatpush1.msra.mxu0 0.0
    %698 = vmatprep.subr.mxu0 0.0
    %699 = vmatpush1.msra.mxu0 0.0
    %700 = vmatprep.subr.mxu0 0.0
    %701 = vmatpush1.msra.mxu0 0.0
    %702 = vmatprep.subr.mxu0 0.0
    %703 = vmatpush1.msra.mxu0 0.0
    %704 = vmatprep.subr.mxu0 0.0
    %705 = vmatpush1.msra.mxu0 0.0
    %706 = vmatprep.subr.mxu0 0.0
    %707 = vmatpush1.msra.mxu0 %v48
    %708 = vmatprep.subr.mxu0 0.0
    %709 = vmatpush1.msra.mxu0 %v47
    %710 = vmatprep.subr.mxu0 0.0
    %711 = vmatpush2.msra.mxu0 0.0
    %712 = vmatprep.subr.mxu0 0.0
    %713 = vmatpush2.msra.mxu0 0.0
    %714 = vmatprep.subr.mxu0 0.0
    %715 = vmatpush2.msra.mxu0 0.0
    %716 = vmatprep.subr.mxu0 0.0
    %717 = vmatpush2.msra.mxu0 0.0
    %718 = vmatprep.subr.mxu0 0.0
    %719 = vmatpush2.msra.mxu0 0.0
    %720 = vmatprep.subr.mxu0 0.0
    %721 = vmatpush2.msra.mxu0 0.0
    %722 = vmatprep.subr.mxu0 0.0
    %723 = vmatpush2.msra.mxu0 0.0
    %724 = vmatprep.subr.mxu0 0.0
    %725 = vmatpush2.msra.mxu0 0.0
    %726 = vmatprep.subr.mxu0 0.0
    %727 = vmatpush2.msra.mxu0 0.0
    %728 = vmatprep.subr.mxu0 0.0
    %729 = vmatpush2.msra.mxu0 0.0
    %730 = vmatprep.subr.mxu0 0.0
    %731 = vmatpush2.msra.mxu0 0.0
    %732 = vmatprep.subr.mxu0 0.0
    %733 = vmatpush2.msra.mxu0 0.0
    %734 = vmatprep.subr.mxu0 0.0
    %735 = vmatpush2.msra.mxu0 0.0
    %736 = vmatprep.subr.mxu0 0.0
    %737 = vmatpush2.msra.mxu0 0.0
    %738 = vmatprep.subr.mxu0 0.0
    %739 = vmatpush2.msra.mxu0 0.0
    %740 = vmatprep.subr.mxu0 0.0
    %741 = vmatpush2.msra.mxu0 0.0
    %742 = vmatprep.mubr.f32.mxu0 0.0
    %743 = vmatmul.mubr.f32.gmra.mxu0 %v527
    %v744 = vpop.f32.mrf.mxu0
    %v745 = vadd.f32 0.0, %v744
    %v746 = vpop.f32.mrf.mxu0
    %747 = vdwg.mxu0
    %749 = vrot.lane.b32.xlu0 %v745, 32
    %v750 = vpop.permute.xlu0 %749
    %v752 = vadd.f32 %v141, %v750
    %v753 = vtanh.pop %v752
    %755 = vrot.lane.b32.xlu0 %v753, 96
    %v756 = vpop.permute.xlu0 %755
    %v757 = vsel %vm151, %v756, 0
    %759 = vmatprep.subr.mxu0 0.0
    %760 = vmatpush1.msra.mxu0 0.0
    %761 = vmatprep.subr.mxu0 0.0
    %762 = vmatpush1.msra.mxu0 0.0
    %763 = vmatprep.subr.mxu0 0.0
    %764 = vmatpush1.msra.mxu0 0.0
    %765 = vmatprep.subr.mxu0 0.0
    %766 = vmatpush1.msra.mxu0 0.0
    %767 = vmatprep.subr.mxu0 0.0
    %768 = vmatpush1.msra.mxu0 0.0
    %769 = vmatprep.subr.mxu0 0.0
    %770 = vmatpush1.msra.mxu0 0.0
    %771 = vmatprep.subr.mxu0 0.0
    %772 = vmatpush1.msra.mxu0 0.0
    %773 = vmatprep.subr.mxu0 0.0
    %774 = vmatpush1.msra.mxu0 0.0
    %775 = vmatprep.subr.mxu0 0.0
    %776 = vmatpush1.msra.mxu0 0.0
    %777 = vmatprep.subr.mxu0 0.0
    %778 = vmatpush1.msra.mxu0 0.0
    %779 = vmatprep.subr.mxu0 0.0
    %780 = vmatpush1.msra.mxu0 0.0
    %781 = vmatprep.subr.mxu0 0.0
    %782 = vmatpush1.msra.mxu0 0.0
    %783 = vmatprep.subr.mxu0 0.0
    %784 = vmatpush1.msra.mxu0 0.0
    %785 = vmatprep.subr.mxu0 0.0
    %786 = vmatpush1.msra.mxu0 0.0
    %787 = vmatprep.subr.mxu0 0.0
    %788 = vmatpush1.msra.mxu0 %v50
    %789 = vmatprep.subr.mxu0 0.0
    %790 = vmatpush1.msra.mxu0 %v49
    %791 = vmatprep.subr.mxu0 0.0
    %792 = vmatpush2.msra.mxu0 0.0
    %793 = vmatprep.subr.mxu0 0.0
    %794 = vmatpush2.msra.mxu0 0.0
    %795 = vmatprep.subr.mxu0 0.0
    %796 = vmatpush2.msra.mxu0 0.0
    %797 = vmatprep.subr.mxu0 0.0
    %798 = vmatpush2.msra.mxu0 0.0
    %799 = vmatprep.subr.mxu0 0.0
    %800 = vmatpush2.msra.mxu0 0.0
    %801 = vmatprep.subr.mxu0 0.0
    %802 = vmatpush2.msra.mxu0 0.0
    %803 = vmatprep.subr.mxu0 0.0
    %804 = vmatpush2.msra.mxu0 0.0
    %805 = vmatprep.subr.mxu0 0.0
    %806 = vmatpush2.msra.mxu0 0.0
    %807 = vmatprep.subr.mxu0 0.0
    %808 = vmatpush2.msra.mxu0 0.0
    %809 = vmatprep.subr.mxu0 0.0
    %810 = vmatpush2.msra.mxu0 0.0
    %811 = vmatprep.subr.mxu0 0.0
    %812 = vmatpush2.msra.mxu0 0.0
    %813 = vmatprep.subr.mxu0 0.0
    %814 = vmatpush2.msra.mxu0 0.0
    %815 = vmatprep.subr.mxu0 0.0
    %816 = vmatpush2.msra.mxu0 0.0
    %817 = vmatprep.subr.mxu0 0.0
    %818 = vmatpush2.msra.mxu0 0.0
    %819 = vmatprep.subr.mxu0 0.0
    %820 = vmatpush2.msra.mxu0 0.0
    %821 = vmatprep.subr.mxu0 0.0
    %822 = vmatpush2.msra.mxu0 0.0
    %823 = vmatprep.mubr.f32.mxu0 0.0
    %824 = vmatmul.mubr.f32.gmra.mxu0 %v757
    %v825 = vpop.f32.mrf.mxu0
    %v826 = vadd.f32 %v675, %v825
    %v827 = vpop.f32.mrf.mxu0
    %828 = vdwg.mxu0
    %v829 = vtanh.pop %v826
    %831 = vrot.lane.b32.xlu0 %v829, 32
    %v832 = vpop.permute.xlu0 %831
    %vm834 = vcmask 392448
    %835 = vst.msk [vmem:[#allocation2] sm:$0xff] %vm834, %v832
    %v836 = vsel %vm151, %v829, 0
    %838 = vmatprep.subr.mxu0 0.0
    %839 = vmatpush1.msra.mxu0 0.0
    %840 = vmatprep.subr.mxu0 0.0
    %841 = vmatpush1.msra.mxu0 0.0
    %842 = vmatprep.subr.mxu0 0.0
    %843 = vmatpush1.msra.mxu0 0.0
    %844 = vmatprep.subr.mxu0 0.0
    %845 = vmatpush1.msra.mxu0 0.0
    %846 = vmatprep.subr.mxu0 0.0
    %847 = vmatpush1.msra.mxu0 0.0
    %848 = vmatprep.subr.mxu0 0.0
    %849 = vmatpush1.msra.mxu0 0.0
    %850 = vmatprep.subr.mxu0 0.0
    %851 = vmatpush1.msra.mxu0 0.0
    %852 = vmatprep.subr.mxu0 0.0
    %853 = vmatpush1.msra.mxu0 0.0
    %854 = vmatprep.subr.mxu0 0.0
    %855 = vmatpush1.msra.mxu0 0.0
    %856 = vmatprep.subr.mxu0 0.0
    %857 = vmatpush1.msra.mxu0 0.0
    %858 = vmatprep.subr.mxu0 0.0
    %859 = vmatpush1.msra.mxu0 0.0
    %860 = vmatprep.subr.mxu0 0.0
    %861 = vmatpush1.msra.mxu0 0.0
    %862 = vmatprep.subr.mxu0 0.0
    %863 = vmatpush1.msra.mxu0 0.0
    %864 = vmatprep.subr.mxu0 0.0
    %865 = vmatpush1.msra.mxu0 0.0
    %866 = vmatprep.subr.mxu0 0.0
    %867 = vmatpush1.msra.mxu0 %v52
    %868 = vmatprep.subr.mxu0 0.0
    %869 = vmatpush1.msra.mxu0 %v51
    %870 = vmatprep.subr.mxu0 0.0
    %871 = vmatpush2.msra.mxu0 0.0
    %872 = vmatprep.subr.mxu0 0.0
    %873 = vmatpush2.msra.mxu0 0.0
    %874 = vmatprep.subr.mxu0 0.0
    %875 = vmatpush2.msra.mxu0 0.0
    %876 = vmatprep.subr.mxu0 0.0
    %877 = vmatpush2.msra.mxu0 0.0
    %878 = vmatprep.subr.mxu0 0.0
    %879 = vmatpush2.msra.mxu0 0.0
    %880 = vmatprep.subr.mxu0 0.0
    %881 = vmatpush2.msra.mxu0 0.0
    %882 = vmatprep.subr.mxu0 0.0
    %883 = vmatpush2.msra.mxu0 0.0
    %884 = vmatprep.subr.mxu0 0.0
    %885 = vmatpush2.msra.mxu0 0.0
    %886 = vmatprep.subr.mxu0 0.0
    %887 = vmatpush2.msra.mxu0 0.0
    %888 = vmatprep.subr.mxu0 0.0
    %889 = vmatpush2.msra.mxu0 0.0
    %890 = vmatprep.subr.mxu0 0.0
    %891 = vmatpush2.msra.mxu0 0.0
    %892 = vmatprep.subr.mxu0 0.0
    %893 = vmatpush2.msra.mxu0 0.0
    %894 = vmatprep.subr.mxu0 0.0
    %895 = vmatpush2.msra.mxu0 0.0
    %896 = vmatprep.subr.mxu0 0.0
    %897 = vmatpush2.msra.mxu0 0.0
    %898 = vmatprep.subr.mxu0 0.0
    %899 = vmatpush2.msra.mxu0 0.0
    %900 = vmatprep.subr.mxu0 0.0
    %901 = vmatpush2.msra.mxu0 0.0
    %902 = vmatprep.mubr.f32.mxu0 0.0
    %903 = vmatmul.mubr.f32.gmra.mxu0 %v836
    %v904 = vpop.f32.mrf.mxu0
    %v905 = vadd.f32 %v149, %v904
    %v906 = vpop.f32.mrf.mxu0
    %907 = vdwg.mxu0
    %908 = vmatprep.subr.mxu0 0.0
    %909 = vmatpush1.msra.mxu0 0.0
    %910 = vmatprep.subr.mxu0 0.0
    %911 = vmatpush1.msra.mxu0 0.0
    %912 = vmatprep.subr.mxu0 0.0
    %913 = vmatpush1.msra.mxu0 0.0
    %914 = vmatprep.subr.mxu0 0.0
    %915 = vmatpush1.msra.mxu0 0.0
    %916 = vmatprep.subr.mxu0 0.0
    %917 = vmatpush1.msra.mxu0 0.0
    %918 = vmatprep.subr.mxu0 0.0
    %919 = vmatpush1.msra.mxu0 0.0
    %920 = vmatprep.subr.mxu0 0.0
    %921 = vmatpush1.msra.mxu0 0.0
    %922 = vmatprep.subr.mxu0 0.0
    %923 = vmatpush1.msra.mxu0 0.0
    %924 = vmatprep.subr.mxu0 0.0
    %925 = vmatpush1.msra.mxu0 0.0
    %926 = vmatprep.subr.mxu0 0.0
    %927 = vmatpush1.msra.mxu0 0.0
    %928 = vmatprep.subr.mxu0 0.0
    %929 = vmatpush1.msra.mxu0 0.0
    %930 = vmatprep.subr.mxu0 0.0
    %931 = vmatpush1.msra.mxu0 0.0
    %932 = vmatprep.subr.mxu0 0.0
    %933 = vmatpush1.msra.mxu0 0.0
    %934 = vmatprep.subr.mxu0 0.0
    %935 = vmatpush1.msra.mxu0 0.0
    %936 = vmatprep.subr.mxu0 0.0
    %937 = vmatpush1.msra.mxu0 %v48
    %938 = vmatprep.subr.mxu0 0.0
    %939 = vmatpush1.msra.mxu0 %v47
    %940 = vmatprep.subr.mxu0 0.0
    %941 = vmatpush2.msra.mxu0 0.0
    %942 = vmatprep.subr.mxu0 0.0
    %943 = vmatpush2.msra.mxu0 0.0
    %944 = vmatprep.subr.mxu0 0.0
    %945 = vmatpush2.msra.mxu0 0.0
    %946 = vmatprep.subr.mxu0 0.0
    %947 = vmatpush2.msra.mxu0 0.0
    %948 = vmatprep.subr.mxu0 0.0
    %949 = vmatpush2.msra.mxu0 0.0
    %950 = vmatprep.subr.mxu0 0.0
    %951 = vmatpush2.msra.mxu0 0.0
    %952 = vmatprep.subr.mxu0 0.0
    %953 = vmatpush2.msra.mxu0 0.0
    %954 = vmatprep.subr.mxu0 0.0
    %955 = vmatpush2.msra.mxu0 0.0
    %956 = vmatprep.subr.mxu0 0.0
    %957 = vmatpush2.msra.mxu0 0.0
    %958 = vmatprep.subr.mxu0 0.0
    %959 = vmatpush2.msra.mxu0 0.0
    %960 = vmatprep.subr.mxu0 0.0
    %961 = vmatpush2.msra.mxu0 0.0
    %962 = vmatprep.subr.mxu0 0.0
    %963 = vmatpush2.msra.mxu0 0.0
    %964 = vmatprep.subr.mxu0 0.0
    %965 = vmatpush2.msra.mxu0 0.0
    %966 = vmatprep.subr.mxu0 0.0
    %967 = vmatpush2.msra.mxu0 0.0
    %968 = vmatprep.subr.mxu0 0.0
    %969 = vmatpush2.msra.mxu0 0.0
    %970 = vmatprep.subr.mxu0 0.0
    %971 = vmatpush2.msra.mxu0 0.0
    %972 = vmatprep.mubr.f32.mxu0 0.0
    %973 = vmatmul.mubr.f32.gmra.mxu0 %v757
    %v974 = vpop.f32.mrf.mxu0
    %v975 = vadd.f32 0.0, %v974
    %v976 = vpop.f32.mrf.mxu0
    %977 = vdwg.mxu0
    %979 = vrot.lane.b32.xlu0 %v975, 48
    %v980 = vpop.permute.xlu0 %979
    %v982 = vadd.f32 %v141, %v980
    %v983 = vtanh.pop %v982
    %985 = vrot.lane.b32.xlu0 %v983, 80
    %v986 = vpop.permute.xlu0 %985
    %v987 = vsel %vm151, %v986, 0
    %989 = vmatprep.subr.mxu0 0.0
    %990 = vmatpush1.msra.mxu0 0.0
    %991 = vmatprep.subr.mxu0 0.0
    %992 = vmatpush1.msra.mxu0 0.0
    %993 = vmatprep.subr.mxu0 0.0
    %994 = vmatpush1.msra.mxu0 0.0
    %995 = vmatprep.subr.mxu0 0.0
    %996 = vmatpush1.msra.mxu0 0.0
    %997 = vmatprep.subr.mxu0 0.0
    %998 = vmatpush1.msra.mxu0 0.0
    %999 = vmatprep.subr.mxu0 0.0
    %1000 = vmatpush1.msra.mxu0 0.0
    %1001 = vmatprep.subr.mxu0 0.0
    %1002 = vmatpush1.msra.mxu0 0.0
    %1003 = vmatprep.subr.mxu0 0.0
    %1004 = vmatpush1.msra.mxu0 0.0
    %1005 = vmatprep.subr.mxu0 0.0
    %1006 = vmatpush1.msra.mxu0 0.0
    %1007 = vmatprep.subr.mxu0 0.0
    %1008 = vmatpush1.msra.mxu0 0.0
    %1009 = vmatprep.subr.mxu0 0.0
    %1010 = vmatpush1.msra.mxu0 0.0
    %1011 = vmatprep.subr.mxu0 0.0
    %1012 = vmatpush1.msra.mxu0 0.0
    %1013 = vmatprep.subr.mxu0 0.0
    %1014 = vmatpush1.msra.mxu0 0.0
    %1015 = vmatprep.subr.mxu0 0.0
    %1016 = vmatpush1.msra.mxu0 0.0
    %1017 = vmatprep.subr.mxu0 0.0
    %1018 = vmatpush1.msra.mxu0 %v50
    %1019 = vmatprep.subr.mxu0 0.0
    %1020 = vmatpush1.msra.mxu0 %v49
    %1021 = vmatprep.subr.mxu0 0.0
    %1022 = vmatpush2.msra.mxu0 0.0
    %1023 = vmatprep.subr.mxu0 0.0
    %1024 = vmatpush2.msra.mxu0 0.0
    %1025 = vmatprep.subr.mxu0 0.0
    %1026 = vmatpush2.msra.mxu0 0.0
    %1027 = vmatprep.subr.mxu0 0.0
    %1028 = vmatpush2.msra.mxu0 0.0
    %1029 = vmatprep.subr.mxu0 0.0
    %1030 = vmatpush2.msra.mxu0 0.0
    %1031 = vmatprep.subr.mxu0 0.0
    %1032 = vmatpush2.msra.mxu0 0.0
    %1033 = vmatprep.subr.mxu0 0.0
    %1034 = vmatpush2.msra.mxu0 0.0
    %1035 = vmatprep.subr.mxu0 0.0
    %1036 = vmatpush2.msra.mxu0 0.0
    %1037 = vmatprep.subr.mxu0 0.0
    %1038 = vmatpush2.msra.mxu0 0.0
    %1039 = vmatprep.subr.mxu0 0.0
    %1040 = vmatpush2.msra.mxu0 0.0
    %1041 = vmatprep.subr.mxu0 0.0
    %1042 = vmatpush2.msra.mxu0 0.0
    %1043 = vmatprep.subr.mxu0 0.0
    %1044 = vmatpush2.msra.mxu0 0.0
    %1045 = vmatprep.subr.mxu0 0.0
    %1046 = vmatpush2.msra.mxu0 0.0
    %1047 = vmatprep.subr.mxu0 0.0
    %1048 = vmatpush2.msra.mxu0 0.0
    %1049 = vmatprep.subr.mxu0 0.0
    %1050 = vmatpush2.msra.mxu0 0.0
    %1051 = vmatprep.subr.mxu0 0.0
    %1052 = vmatpush2.msra.mxu0 0.0
    %1053 = vmatprep.mubr.f32.mxu0 0.0
    %1054 = vmatmul.mubr.f32.gmra.mxu0 %v987
    %v1055 = vpop.f32.mrf.mxu0
    %v1056 = vadd.f32 %v905, %v1055
    %v1057 = vpop.f32.mrf.mxu0
    %1058 = vdwg.mxu0
    %v1059 = vtanh.pop %v1056
    %1061 = vrot.lane.b32.xlu0 %v1059, 48
    %v1062 = vpop.permute.xlu0 %1061
    %vm1064 = vcmask 523648
    %1065 = vst.msk [vmem:[#allocation2] sm:$0xff] %vm1064, %v1062
    %v1066 = vsel %vm151, %v1059, 0
    %1068 = vmatprep.subr.mxu0 0.0
    %1069 = vmatpush1.msra.mxu0 0.0
    %1070 = vmatprep.subr.mxu0 0.0
    %1071 = vmatpush1.msra.mxu0 0.0
    %1072 = vmatprep.subr.mxu0 0.0
    %1073 = vmatpush1.msra.mxu0 0.0
    %1074 = vmatprep.subr.mxu0 0.0
    %1075 = vmatpush1.msra.mxu0 0.0
    %1076 = vmatprep.subr.mxu0 0.0
    %1077 = vmatpush1.msra.mxu0 0.0
    %1078 = vmatprep.subr.mxu0 0.0
    %1079 = vmatpush1.msra.mxu0 0.0
    %1080 = vmatprep.subr.mxu0 0.0
    %1081 = vmatpush1.msra.mxu0 0.0
    %1082 = vmatprep.subr.mxu0 0.0
    %1083 = vmatpush1.msra.mxu0 0.0
    %1084 = vmatprep.subr.mxu0 0.0
    %1085 = vmatpush1.msra.mxu0 0.0
    %1086 = vmatprep.subr.mxu0 0.0
    %1087 = vmatpush1.msra.mxu0 0.0
    %1088 = vmatprep.subr.mxu0 0.0
    %1089 = vmatpush1.msra.mxu0 0.0
    %1090 = vmatprep.subr.mxu0 0.0
    %1091 = vmatpush1.msra.mxu0 0.0
    %1092 = vmatprep.subr.mxu0 0.0
    %1093 = vmatpush1.msra.mxu0 0.0
    %1094 = vmatprep.subr.mxu0 0.0
    %1095 = vmatpush1.msra.mxu0 0.0
    %1096 = vmatprep.subr.mxu0 0.0
    %1097 = vmatpush1.msra.mxu0 %v52
    %1098 = vmatprep.subr.mxu0 0.0
    %1099 = vmatpush1.msra.mxu0 %v51
    %1100 = vmatprep.subr.mxu0 0.0
    %1101 = vmatpush2.msra.mxu0 0.0
    %1102 = vmatprep.subr.mxu0 0.0
    %1103 = vmatpush2.msra.mxu0 0.0
    %1104 = vmatprep.subr.mxu0 0.0
    %1105 = vmatpush2.msra.mxu0 0.0
    %1106 = vmatprep.subr.mxu0 0.0
    %1107 = vmatpush2.msra.mxu0 0.0
    %1108 = vmatprep.subr.mxu0 0.0
    %1109 = vmatpush2.msra.mxu0 0.0
    %1110 = vmatprep.subr.mxu0 0.0
    %1111 = vmatpush2.msra.mxu0 0.0
    %1112 = vmatprep.subr.mxu0 0.0
    %1113 = vmatpush2.msra.mxu0 0.0
    %1114 = vmatprep.subr.mxu0 0.0
    %1115 = vmatpush2.msra.mxu0 0.0
    %1116 = vmatprep.subr.mxu0 0.0
    %1117 = vmatpush2.msra.mxu0 0.0
    %1118 = vmatprep.subr.mxu0 0.0
    %1119 = vmatpush2.msra.mxu0 0.0
    %1120 = vmatprep.subr.mxu0 0.0
    %1121 = vmatpush2.msra.mxu0 0.0
    %1122 = vmatprep.subr.mxu0 0.0
    %1123 = vmatpush2.msra.mxu0 0.0
    %1124 = vmatprep.subr.mxu0 0.0
    %1125 = vmatpush2.msra.mxu0 0.0
    %1126 = vmatprep.subr.mxu0 0.0
    %1127 = vmatpush2.msra.mxu0 0.0
    %1128 = vmatprep.subr.mxu0 0.0
    %1129 = vmatpush2.msra.mxu0 0.0
    %1130 = vmatprep.subr.mxu0 0.0
    %1131 = vmatpush2.msra.mxu0 0.0
    %1132 = vmatprep.mubr.f32.mxu0 0.0
    %1133 = vmatmul.mubr.f32.gmra.mxu0 %v1066
    %v1134 = vpop.f32.mrf.mxu0
    %v1135 = vadd.f32 %v149, %v1134
    %v1136 = vpop.f32.mrf.mxu0
    %1137 = vdwg.mxu0
    %1138 = vmatprep.subr.mxu0 0.0
    %1139 = vmatpush1.msra.mxu0 0.0
    %1140 = vmatprep.subr.mxu0 0.0
    %1141 = vmatpush1.msra.mxu0 0.0
    %1142 = vmatprep.subr.mxu0 0.0
    %1143 = vmatpush1.msra.mxu0 0.0
    %1144 = vmatprep.subr.mxu0 0.0
    %1145 = vmatpush1.msra.mxu0 0.0
    %1146 = vmatprep.subr.mxu0 0.0
    %1147 = vmatpush1.msra.mxu0 0.0
    %1148 = vmatprep.subr.mxu0 0.0
    %1149 = vmatpush1.msra.mxu0 0.0
    %1150 = vmatprep.subr.mxu0 0.0
    %1151 = vmatpush1.msra.mxu0 0.0
    %1152 = vmatprep.subr.mxu0 0.0
    %1153 = vmatpush1.msra.mxu0 0.0
    %1154 = vmatprep.subr.mxu0 0.0
    %1155 = vmatpush1.msra.mxu0 0.0
    %1156 = vmatprep.subr.mxu0 0.0
    %1157 = vmatpush1.msra.mxu0 0.0
    %1158 = vmatprep.subr.mxu0 0.0
    %1159 = vmatpush1.msra.mxu0 0.0
    %1160 = vmatprep.subr.mxu0 0.0
    %1161 = vmatpush1.msra.mxu0 0.0
    %1162 = vmatprep.subr.mxu0 0.0
    %1163 = vmatpush1.msra.mxu0 0.0
    %1164 = vmatprep.subr.mxu0 0.0
    %1165 = vmatpush1.msra.mxu0 0.0
    %1166 = vmatprep.subr.mxu0 0.0
    %1167 = vmatpush1.msra.mxu0 %v48
    %1168 = vmatprep.subr.mxu0 0.0
    %1169 = vmatpush1.msra.mxu0 %v47
    %1170 = vmatprep.subr.mxu0 0.0
    %1171 = vmatpush2.msra.mxu0 0.0
    %1172 = vmatprep.subr.mxu0 0.0
    %1173 = vmatpush2.msra.mxu0 0.0
    %1174 = vmatprep.subr.mxu0 0.0
    %1175 = vmatpush2.msra.mxu0 0.0
    %1176 = vmatprep.subr.mxu0 0.0
    %1177 = vmatpush2.msra.mxu0 0.0
    %1178 = vmatprep.subr.mxu0 0.0
    %1179 = vmatpush2.msra.mxu0 0.0
    %1180 = vmatprep.subr.mxu0 0.0
    %1181 = vmatpush2.msra.mxu0 0.0
    %1182 = vmatprep.subr.mxu0 0.0
    %1183 = vmatpush2.msra.mxu0 0.0
    %1184 = vmatprep.subr.mxu0 0.0
    %1185 = vmatpush2.msra.mxu0 0.0
    %1186 = vmatprep.subr.mxu0 0.0
    %1187 = vmatpush2.msra.mxu0 0.0
    %1188 = vmatprep.subr.mxu0 0.0
    %1189 = vmatpush2.msra.mxu0 0.0
    %1190 = vmatprep.subr.mxu0 0.0
    %1191 = vmatpush2.msra.mxu0 0.0
    %1192 = vmatprep.subr.mxu0 0.0
    %1193 = vmatpush2.msra.mxu0 0.0
    %1194 = vmatprep.subr.mxu0 0.0
    %1195 = vmatpush2.msra.mxu0 0.0
    %1196 = vmatprep.subr.mxu0 0.0
    %1197 = vmatpush2.msra.mxu0 0.0
    %1198 = vmatprep.subr.mxu0 0.0
    %1199 = vmatpush2.msra.mxu0 0.0
    %1200 = vmatprep.subr.mxu0 0.0
    %1201 = vmatpush2.msra.mxu0 0.0
    %1202 = vmatprep.mubr.f32.mxu0 0.0
    %1203 = vmatmul.mubr.f32.gmra.mxu0 %v987
    %v1204 = vpop.f32.mrf.mxu0
    %v1205 = vadd.f32 0.0, %v1204
    %v1206 = vpop.f32.mrf.mxu0
    %1207 = vdwg.mxu0
    %1209 = vrot.lane.b32.xlu0 %v1205, 64
    %v1210 = vpop.permute.xlu0 %1209
    %v1212 = vadd.f32 %v141, %v1210
    %v1213 = vtanh.pop %v1212
    %1215 = vrot.lane.b32.xlu0 %v1213, 64
    %v1216 = vpop.permute.xlu0 %1215
    %v1217 = vsel %vm151, %v1216, 0
    %1219 = vmatprep.subr.mxu0 0.0
    %1220 = vmatpush1.msra.mxu0 0.0
    %1221 = vmatprep.subr.mxu0 0.0
    %1222 = vmatpush1.msra.mxu0 0.0
    %1223 = vmatprep.subr.mxu0 0.0
    %1224 = vmatpush1.msra.mxu0 0.0
    %1225 = vmatprep.subr.mxu0 0.0
    %1226 = vmatpush1.msra.mxu0 0.0
    %1227 = vmatprep.subr.mxu0 0.0
    %1228 = vmatpush1.msra.mxu0 0.0
    %1229 = vmatprep.subr.mxu0 0.0
    %1230 = vmatpush1.msra.mxu0 0.0
    %1231 = vmatprep.subr.mxu0 0.0
    %1232 = vmatpush1.msra.mxu0 0.0
    %1233 = vmatprep.subr.mxu0 0.0
    %1234 = vmatpush1.msra.mxu0 0.0
    %1235 = vmatprep.subr.mxu0 0.0
    %1236 = vmatpush1.msra.mxu0 0.0
    %1237 = vmatprep.subr.mxu0 0.0
    %1238 = vmatpush1.msra.mxu0 0.0
    %1239 = vmatprep.subr.mxu0 0.0
    %1240 = vmatpush1.msra.mxu0 0.0
    %1241 = vmatprep.subr.mxu0 0.0
    %1242 = vmatpush1.msra.mxu0 0.0
    %1243 = vmatprep.subr.mxu0 0.0
    %1244 = vmatpush1.msra.mxu0 0.0
    %1245 = vmatprep.subr.mxu0 0.0
    %1246 = vmatpush1.msra.mxu0 0.0
    %1247 = vmatprep.subr.mxu0 0.0
    %1248 = vmatpush1.msra.mxu0 %v50
    %1249 = vmatprep.subr.mxu0 0.0
    %1250 = vmatpush1.msra.mxu0 %v49
    %1251 = vmatprep.subr.mxu0 0.0
    %1252 = vmatpush2.msra.mxu0 0.0
    %1253 = vmatprep.subr.mxu0 0.0
    %1254 = vmatpush2.msra.mxu0 0.0
    %1255 = vmatprep.subr.mxu0 0.0
    %1256 = vmatpush2.msra.mxu0 0.0
    %1257 = vmatprep.subr.mxu0 0.0
    %1258 = vmatpush2.msra.mxu0 0.0
    %1259 = vmatprep.subr.mxu0 0.0
    %1260 = vmatpush2.msra.mxu0 0.0
    %1261 = vmatprep.subr.mxu0 0.0
    %1262 = vmatpush2.msra.mxu0 0.0
    %1263 = vmatprep.subr.mxu0 0.0
    %1264 = vmatpush2.msra.mxu0 0.0
    %1265 = vmatprep.subr.mxu0 0.0
    %1266 = vmatpush2.msra.mxu0 0.0
    %1267 = vmatprep.subr.mxu0 0.0
    %1268 = vmatpush2.msra.mxu0 0.0
    %1269 = vmatprep.subr.mxu0 0.0
    %1270 = vmatpush2.msra.mxu0 0.0
    %1271 = vmatprep.subr.mxu0 0.0
    %1272 = vmatpush2.msra.mxu0 0.0
    %1273 = vmatprep.subr.mxu0 0.0
    %1274 = vmatpush2.msra.mxu0 0.0
    %1275 = vmatprep.subr.mxu0 0.0
    %1276 = vmatpush2.msra.mxu0 0.0
    %1277 = vmatprep.subr.mxu0 0.0
    %1278 = vmatpush2.msra.mxu0 0.0
    %1279 = vmatprep.subr.mxu0 0.0
    %1280 = vmatpush2.msra.mxu0 0.0
    %1281 = vmatprep.subr.mxu0 0.0
    %1282 = vmatpush2.msra.mxu0 0.0
    %1283 = vmatprep.mubr.f32.mxu0 0.0
    %1284 = vmatmul.mubr.f32.gmra.mxu0 %v1217
    %v1285 = vpop.f32.mrf.mxu0
    %v1286 = vadd.f32 %v1135, %v1285
    %v1287 = vpop.f32.mrf.mxu0
    %1288 = vdwg.mxu0
    %v1289 = vtanh.pop %v1286
    %1291 = vrot.lane.b32.xlu0 %v1289, 64
    %v1292 = vpop.permute.xlu0 %1291
    %vm1294 = vcmask 654848
    %1295 = vst.msk [vmem:[#allocation2] sm:$0xff] %vm1294, %v1292
    %v1296 = vsel %vm151, %v1289, 0
    %1298 = vmatprep.subr.mxu0 0.0
    %1299 = vmatpush1.msra.mxu0 0.0
    %1300 = vmatprep.subr.mxu0 0.0
    %1301 = vmatpush1.msra.mxu0 0.0
    %1302 = vmatprep.subr.mxu0 0.0
    %1303 = vmatpush1.msra.mxu0 0.0
    %1304 = vmatprep.subr.mxu0 0.0
    %1305 = vmatpush1.msra.mxu0 0.0
    %1306 = vmatprep.subr.mxu0 0.0
    %1307 = vmatpush1.msra.mxu0 0.0
    %1308 = vmatprep.subr.mxu0 0.0
    %1309 = vmatpush1.msra.mxu0 0.0
    %1310 = vmatprep.subr.mxu0 0.0
    %1311 = vmatpush1.msra.mxu0 0.0
    %1312 = vmatprep.subr.mxu0 0.0
    %1313 = vmatpush1.msra.mxu0 0.0
    %1314 = vmatprep.subr.mxu0 0.0
    %1315 = vmatpush1.msra.mxu0 0.0
    %1316 = vmatprep.subr.mxu0 0.0
    %1317 = vmatpush1.msra.mxu0 0.0
    %1318 = vmatprep.subr.mxu0 0.0
    %1319 = vmatpush1.msra.mxu0 0.0
    %1320 = vmatprep.subr.mxu0 0.0
    %1321 = vmatpush1.msra.mxu0 0.0
    %1322 = vmatprep.subr.mxu0 0.0
    %1323 = vmatpush1.msra.mxu0 0.0
    %1324 = vmatprep.subr.mxu0 0.0
    %1325 = vmatpush1.msra.mxu0 0.0
    %1326 = vmatprep.subr.mxu0 0.0
    %1327 = vmatpush1.msra.mxu0 %v52
    %1328 = vmatprep.subr.mxu0 0.0
    %1329 = vmatpush1.msra.mxu0 %v51
    %1330 = vmatprep.subr.mxu0 0.0
    %1331 = vmatpush2.msra.mxu0 0.0
    %1332 = vmatprep.subr.mxu0 0.0
    %1333 = vmatpush2.msra.mxu0 0.0
    %1334 = vmatprep.subr.mxu0 0.0
    %1335 = vmatpush2.msra.mxu0 0.0
    %1336 = vmatprep.subr.mxu0 0.0
    %1337 = vmatpush2.msra.mxu0 0.0
    %1338 = vmatprep.subr.mxu0 0.0
    %1339 = vmatpush2.msra.mxu0 0.0
    %1340 = vmatprep.subr.mxu0 0.0
    %1341 = vmatpush2.msra.mxu0 0.0
    %1342 = vmatprep.subr.mxu0 0.0
    %1343 = vmatpush2.msra.mxu0 0.0
    %1344 = vmatprep.subr.mxu0 0.0
    %1345 = vmatpush2.msra.mxu0 0.0
    %1346 = vmatprep.subr.mxu0 0.0
    %1347 = vmatpush2.msra.mxu0 0.0
    %1348 = vmatprep.subr.mxu0 0.0
    %1349 = vmatpush2.msra.mxu0 0.0
    %1350 = vmatprep.subr.mxu0 0.0
    %1351 = vmatpush2.msra.mxu0 0.0
    %1352 = vmatprep.subr.mxu0 0.0
    %1353 = vmatpush2.msra.mxu0 0.0
    %1354 = vmatprep.subr.mxu0 0.0
    %1355 = vmatpush2.msra.mxu0 0.0
    %1356 = vmatprep.subr.mxu0 0.0
    %1357 = vmatpush2.msra.mxu0 0.0
    %1358 = vmatprep.subr.mxu0 0.0
    %1359 = vmatpush2.msra.mxu0 0.0
    %1360 = vmatprep.subr.mxu0 0.0
    %1361 = vmatpush2.msra.mxu0 0.0
    %1362 = vmatprep.mubr.f32.mxu0 0.0
    %1363 = vmatmul.mubr.f32.gmra.mxu0 %v1296
    %v1364 = vpop.f32.mrf.mxu0
    %v1365 = vadd.f32 %v149, %v1364
    %v1366 = vpop.f32.mrf.mxu0
    %1367 = vdwg.mxu0
    %1368 = vmatprep.subr.mxu0 0.0
    %1369 = vmatpush1.msra.mxu0 0.0
    %1370 = vmatprep.subr.mxu0 0.0
    %1371 = vmatpush1.msra.mxu0 0.0
    %1372 = vmatprep.subr.mxu0 0.0
    %1373 = vmatpush1.msra.mxu0 0.0
    %1374 = vmatprep.subr.mxu0 0.0
    %1375 = vmatpush1.msra.mxu0 0.0
    %1376 = vmatprep.subr.mxu0 0.0
    %1377 = vmatpush1.msra.mxu0 0.0
    %1378 = vmatprep.subr.mxu0 0.0
    %1379 = vmatpush1.msra.mxu0 0.0
    %1380 = vmatprep.subr.mxu0 0.0
    %1381 = vmatpush1.msra.mxu0 0.0
    %1382 = vmatprep.subr.mxu0 0.0
    %1383 = vmatpush1.msra.mxu0 0.0
    %1384 = vmatprep.subr.mxu0 0.0
    %1385 = vmatpush1.msra.mxu0 0.0
    %1386 = vmatprep.subr.mxu0 0.0
    %1387 = vmatpush1.msra.mxu0 0.0
    %1388 = vmatprep.subr.mxu0 0.0
    %1389 = vmatpush1.msra.mxu0 0.0
    %1390 = vmatprep.subr.mxu0 0.0
    %1391 = vmatpush1.msra.mxu0 0.0
    %1392 = vmatprep.subr.mxu0 0.0
    %1393 = vmatpush1.msra.mxu0 0.0
    %1394 = vmatprep.subr.mxu0 0.0
    %1395 = vmatpush1.msra.mxu0 0.0
    %1396 = vmatprep.subr.mxu0 0.0
    %1397 = vmatpush1.msra.mxu0 %v48
    %1398 = vmatprep.subr.mxu0 0.0
    %1399 = vmatpush1.msra.mxu0 %v47
    %1400 = vmatprep.subr.mxu0 0.0
    %1401 = vmatpush2.msra.mxu0 0.0
    %1402 = vmatprep.subr.mxu0 0.0
    %1403 = vmatpush2.msra.mxu0 0.0
    %1404 = vmatprep.subr.mxu0 0.0
    %1405 = vmatpush2.msra.mxu0 0.0
    %1406 = vmatprep.subr.mxu0 0.0
    %1407 = vmatpush2.msra.mxu0 0.0
    %1408 = vmatprep.subr.mxu0 0.0
    %1409 = vmatpush2.msra.mxu0 0.0
    %1410 = vmatprep.subr.mxu0 0.0
    %1411 = vmatpush2.msra.mxu0 0.0
    %1412 = vmatprep.subr.mxu0 0.0
    %1413 = vmatpush2.msra.mxu0 0.0
    %1414 = vmatprep.subr.mxu0 0.0
    %1415 = vmatpush2.msra.mxu0 0.0
    %1416 = vmatprep.subr.mxu0 0.0
    %1417 = vmatpush2.msra.mxu0 0.0
    %1418 = vmatprep.subr.mxu0 0.0
    %1419 = vmatpush2.msra.mxu0 0.0
    %1420 = vmatprep.subr.mxu0 0.0
    %1421 = vmatpush2.msra.mxu0 0.0
    %1422 = vmatprep.subr.mxu0 0.0
    %1423 = vmatpush2.msra.mxu0 0.0
    %1424 = vmatprep.subr.mxu0 0.0
    %1425 = vmatpush2.msra.mxu0 0.0
    %1426 = vmatprep.subr.mxu0 0.0
    %1427 = vmatpush2.msra.mxu0 0.0
    %1428 = vmatprep.subr.mxu0 0.0
    %1429 = vmatpush2.msra.mxu0 0.0
    %1430 = vmatprep.subr.mxu0 0.0
    %1431 = vmatpush2.msra.mxu0 0.0
    %1432 = vmatprep.mubr.f32.mxu0 0.0
    %1433 = vmatmul.mubr.f32.gmra.mxu0 %v1217
    %v1434 = vpop.f32.mrf.mxu0
    %v1435 = vadd.f32 0.0, %v1434
    %v1436 = vpop.f32.mrf.mxu0
    %1437 = vdwg.mxu0
    %1439 = vrot.lane.b32.xlu0 %v1435, 80
    %v1440 = vpop.permute.xlu0 %1439
    %v1442 = vadd.f32 %v141, %v1440
    %v1443 = vtanh.pop %v1442
    %1445 = vrot.lane.b32.xlu0 %v1443, 48
    %v1446 = vpop.permute.xlu0 %1445
    %v1447 = vsel %vm151, %v1446, 0
    %1449 = vmatprep.subr.mxu0 0.0
    %1450 = vmatpush1.msra.mxu0 0.0
    %1451 = vmatprep.subr.mxu0 0.0
    %1452 = vmatpush1.msra.mxu0 0.0
    %1453 = vmatprep.subr.mxu0 0.0
    %1454 = vmatpush1.msra.mxu0 0.0
    %1455 = vmatprep.subr.mxu0 0.0
    %1456 = vmatpush1.msra.mxu0 0.0
    %1457 = vmatprep.subr.mxu0 0.0
    %1458 = vmatpush1.msra.mxu0 0.0
    %1459 = vmatprep.subr.mxu0 0.0
    %1460 = vmatpush1.msra.mxu0 0.0
    %1461 = vmatprep.subr.mxu0 0.0
    %1462 = vmatpush1.msra.mxu0 0.0
    %1463 = vmatprep.subr.mxu0 0.0
    %1464 = vmatpush1.msra.mxu0 0.0
    %1465 = vmatprep.subr.mxu0 0.0
    %1466 = vmatpush1.msra.mxu0 0.0
    %1467 = vmatprep.subr.mxu0 0.0
    %1468 = vmatpush1.msra.mxu0 0.0
    %1469 = vmatprep.subr.mxu0 0.0
    %1470 = vmatpush1.msra.mxu0 0.0
    %1471 = vmatprep.subr.mxu0 0.0
    %1472 = vmatpush1.msra.mxu0 0.0
    %1473 = vmatprep.subr.mxu0 0.0
    %1474 = vmatpush1.msra.mxu0 0.0
    %1475 = vmatprep.subr.mxu0 0.0
    %1476 = vmatpush1.msra.mxu0 0.0
    %1477 = vmatprep.subr.mxu0 0.0
    %1478 = vmatpush1.msra.mxu0 %v50
    %1479 = vmatprep.subr.mxu0 0.0
    %1480 = vmatpush1.msra.mxu0 %v49
    %1481 = vmatprep.subr.mxu0 0.0
    %1482 = vmatpush2.msra.mxu0 0.0
    %1483 = vmatprep.subr.mxu0 0.0
    %1484 = vmatpush2.msra.mxu0 0.0
    %1485 = vmatprep.subr.mxu0 0.0
    %1486 = vmatpush2.msra.mxu0 0.0
    %1487 = vmatprep.subr.mxu0 0.0
    %1488 = vmatpush2.msra.mxu0 0.0
    %1489 = vmatprep.subr.mxu0 0.0
    %1490 = vmatpush2.msra.mxu0 0.0
    %1491 = vmatprep.subr.mxu0 0.0
    %1492 = vmatpush2.msra.mxu0 0.0
    %1493 = vmatprep.subr.mxu0 0.0
    %1494 = vmatpush2.msra.mxu0 0.0
    %1495 = vmatprep.subr.mxu0 0.0
    %1496 = vmatpush2.msra.mxu0 0.0
    %1497 = vmatprep.subr.mxu0 0.0
    %1498 = vmatpush2.msra.mxu0 0.0
    %1499 = vmatprep.subr.mxu0 0.0
    %1500 = vmatpush2.msra.mxu0 0.0
    %1501 = vmatprep.subr.mxu0 0.0
    %1502 = vmatpush2.msra.mxu0 0.0
    %1503 = vmatprep.subr.mxu0 0.0
    %1504 = vmatpush2.msra.mxu0 0.0
    %1505 = vmatprep.subr.mxu0 0.0
    %1506 = vmatpush2.msra.mxu0 0.0
    %1507 = vmatprep.subr.mxu0 0.0
    %1508 = vmatpush2.msra.mxu0 0.0
    %1509 = vmatprep.subr.mxu0 0.0
    %1510 = vmatpush2.msra.mxu0 0.0
    %1511 = vmatprep.subr.mxu0 0.0
    %1512 = vmatpush2.msra.mxu0 0.0
    %1513 = vmatprep.mubr.f32.mxu0 0.0
    %1514 = vmatmul.mubr.f32.gmra.mxu0 %v1447
    %v1515 = vpop.f32.mrf.mxu0
    %v1516 = vadd.f32 %v1365, %v1515
    %v1517 = vpop.f32.mrf.mxu0
    %1518 = vdwg.mxu0
    %v1519 = vtanh.pop %v1516
    %1521 = vrot.lane.b32.xlu0 %v1519, 80
    %v1522 = vpop.permute.xlu0 %1521
    %vm1524 = vcmask 786048
    %1525 = vst.msk [vmem:[#allocation2] sm:$0xff] %vm1524, %v1522
    %v1526 = vsel %vm151, %v1519, 0
    %1528 = vmatprep.subr.mxu0 0.0
    %1529 = vmatpush1.msra.mxu0 0.0
    %1530 = vmatprep.subr.mxu0 0.0
    %1531 = vmatpush1.msra.mxu0 0.0
    %1532 = vmatprep.subr.mxu0 0.0
    %1533 = vmatpush1.msra.mxu0 0.0
    %1534 = vmatprep.subr.mxu0 0.0
    %1535 = vmatpush1.msra.mxu0 0.0
    %1536 = vmatprep.subr.mxu0 0.0
    %1537 = vmatpush1.msra.mxu0 0.0
    %1538 = vmatprep.subr.mxu0 0.0
    %1539 = vmatpush1.msra.mxu0 0.0
    %1540 = vmatprep.subr.mxu0 0.0
    %1541 = vmatpush1.msra.mxu0 0.0
    %1542 = vmatprep.subr.mxu0 0.0
    %1543 = vmatpush1.msra.mxu0 0.0
    %1544 = vmatprep.subr.mxu0 0.0
    %1545 = vmatpush1.msra.mxu0 0.0
    %1546 = vmatprep.subr.mxu0 0.0
    %1547 = vmatpush1.msra.mxu0 0.0
    %1548 = vmatprep.subr.mxu0 0.0
    %1549 = vmatpush1.msra.mxu0 0.0
    %1550 = vmatprep.subr.mxu0 0.0
    %1551 = vmatpush1.msra.mxu0 0.0
    %1552 = vmatprep.subr.mxu0 0.0
    %1553 = vmatpush1.msra.mxu0 0.0
    %1554 = vmatprep.subr.mxu0 0.0
    %1555 = vmatpush1.msra.mxu0 0.0
    %1556 = vmatprep.subr.mxu0 0.0
    %1557 = vmatpush1.msra.mxu0 %v52
    %1558 = vmatprep.subr.mxu0 0.0
    %1559 = vmatpush1.msra.mxu0 %v51
    %1560 = vmatprep.subr.mxu0 0.0
    %1561 = vmatpush2.msra.mxu0 0.0
    %1562 = vmatprep.subr.mxu0 0.0
    %1563 = vmatpush2.msra.mxu0 0.0
    %1564 = vmatprep.subr.mxu0 0.0
    %1565 = vmatpush2.msra.mxu0 0.0
    %1566 = vmatprep.subr.mxu0 0.0
    %1567 = vmatpush2.msra.mxu0 0.0
    %1568 = vmatprep.subr.mxu0 0.0
    %1569 = vmatpush2.msra.mxu0 0.0
    %1570 = vmatprep.subr.mxu0 0.0
    %1571 = vmatpush2.msra.mxu0 0.0
    %1572 = vmatprep.subr.mxu0 0.0
    %1573 = vmatpush2.msra.mxu0 0.0
    %1574 = vmatprep.subr.mxu0 0.0
    %1575 = vmatpush2.msra.mxu0 0.0
    %1576 = vmatprep.subr.mxu0 0.0
    %1577 = vmatpush2.msra.mxu0 0.0
    %1578 = vmatprep.subr.mxu0 0.0
    %1579 = vmatpush2.msra.mxu0 0.0
    %1580 = vmatprep.subr.mxu0 0.0
    %1581 = vmatpush2.msra.mxu0 0.0
    %1582 = vmatprep.subr.mxu0 0.0
    %1583 = vmatpush2.msra.mxu0 0.0
    %1584 = vmatprep.subr.mxu0 0.0
    %1585 = vmatpush2.msra.mxu0 0.0
    %1586 = vmatprep.subr.mxu0 0.0
    %1587 = vmatpush2.msra.mxu0 0.0
    %1588 = vmatprep.subr.mxu0 0.0
    %1589 = vmatpush2.msra.mxu0 0.0
    %1590 = vmatprep.subr.mxu0 0.0
    %1591 = vmatpush2.msra.mxu0 0.0
    %1592 = vmatprep.mubr.f32.mxu0 0.0
    %1593 = vmatmul.mubr.f32.gmra.mxu0 %v1526
    %v1594 = vpop.f32.mrf.mxu0
    %v1595 = vadd.f32 %v149, %v1594
    %v1596 = vpop.f32.mrf.mxu0
    %1597 = vdwg.mxu0
    %1598 = vmatprep.subr.mxu0 0.0
    %1599 = vmatpush1.msra.mxu0 0.0
    %1600 = vmatprep.subr.mxu0 0.0
    %1601 = vmatpush1.msra.mxu0 0.0
    %1602 = vmatprep.subr.mxu0 0.0
    %1603 = vmatpush1.msra.mxu0 0.0
    %1604 = vmatprep.subr.mxu0 0.0
    %1605 = vmatpush1.msra.mxu0 0.0
    %1606 = vmatprep.subr.mxu0 0.0
    %1607 = vmatpush1.msra.mxu0 0.0
    %1608 = vmatprep.subr.mxu0 0.0
    %1609 = vmatpush1.msra.mxu0 0.0
    %1610 = vmatprep.subr.mxu0 0.0
    %1611 = vmatpush1.msra.mxu0 0.0
    %1612 = vmatprep.subr.mxu0 0.0
    %1613 = vmatpush1.msra.mxu0 0.0
    %1614 = vmatprep.subr.mxu0 0.0
    %1615 = vmatpush1.msra.mxu0 0.0
    %1616 = vmatprep.subr.mxu0 0.0
    %1617 = vmatpush1.msra.mxu0 0.0
    %1618 = vmatprep.subr.mxu0 0.0
    %1619 = vmatpush1.msra.mxu0 0.0
    %1620 = vmatprep.subr.mxu0 0.0
    %1621 = vmatpush1.msra.mxu0 0.0
    %1622 = vmatprep.subr.mxu0 0.0
    %1623 = vmatpush1.msra.mxu0 0.0
    %1624 = vmatprep.subr.mxu0 0.0
    %1625 = vmatpush1.msra.mxu0 0.0
    %1626 = vmatprep.subr.mxu0 0.0
    %1627 = vmatpush1.msra.mxu0 %v48
    %1628 = vmatprep.subr.mxu0 0.0
    %1629 = vmatpush1.msra.mxu0 %v47
    %1630 = vmatprep.subr.mxu0 0.0
    %1631 = vmatpush2.msra.mxu0 0.0
    %1632 = vmatprep.subr.mxu0 0.0
    %1633 = vmatpush2.msra.mxu0 0.0
    %1634 = vmatprep.subr.mxu0 0.0
    %1635 = vmatpush2.msra.mxu0 0.0
    %1636 = vmatprep.subr.mxu0 0.0
    %1637 = vmatpush2.msra.mxu0 0.0
    %1638 = vmatprep.subr.mxu0 0.0
    %1639 = vmatpush2.msra.mxu0 0.0
    %1640 = vmatprep.subr.mxu0 0.0
    %1641 = vmatpush2.msra.mxu0 0.0
    %1642 = vmatprep.subr.mxu0 0.0
    %1643 = vmatpush2.msra.mxu0 0.0
    %1644 = vmatprep.subr.mxu0 0.0
    %1645 = vmatpush2.msra.mxu0 0.0
    %1646 = vmatprep.subr.mxu0 0.0
    %1647 = vmatpush2.msra.mxu0 0.0
    %1648 = vmatprep.subr.mxu0 0.0
    %1649 = vmatpush2.msra.mxu0 0.0
    %1650 = vmatprep.subr.mxu0 0.0
    %1651 = vmatpush2.msra.mxu0 0.0
    %1652 = vmatprep.subr.mxu0 0.0
    %1653 = vmatpush2.msra.mxu0 0.0
    %1654 = vmatprep.subr.mxu0 0.0
    %1655 = vmatpush2.msra.mxu0 0.0
    %1656 = vmatprep.subr.mxu0 0.0
    %1657 = vmatpush2.msra.mxu0 0.0
    %1658 = vmatprep.subr.mxu0 0.0
    %1659 = vmatpush2.msra.mxu0 0.0
    %1660 = vmatprep.subr.mxu0 0.0
    %1661 = vmatpush2.msra.mxu0 0.0
    %1662 = vmatprep.mubr.f32.mxu0 0.0
    %1663 = vmatmul.mubr.f32.gmra.mxu0 %v1447
    %v1664 = vpop.f32.mrf.mxu0
    %v1665 = vadd.f32 0.0, %v1664
    %v1666 = vpop.f32.mrf.mxu0
    %1667 = vdwg.mxu0
    %1669 = vrot.lane.b32.xlu0 %v1665, 96
    %v1670 = vpop.permute.xlu0 %1669
    %v1672 = vadd.f32 %v141, %v1670
    %v1673 = vtanh.pop %v1672
    %1675 = vrot.lane.b32.xlu0 %v1673, 32
    %v1676 = vpop.permute.xlu0 %1675
    %v1677 = vsel %vm151, %v1676, 0
    %1679 = vmatprep.subr.mxu0 0.0
    %1680 = vmatpush1.msra.mxu0 0.0
    %1681 = vmatprep.subr.mxu0 0.0
    %1682 = vmatpush1.msra.mxu0 0.0
    %1683 = vmatprep.subr.mxu0 0.0
    %1684 = vmatpush1.msra.mxu0 0.0
    %1685 = vmatprep.subr.mxu0 0.0
    %1686 = vmatpush1.msra.mxu0 0.0
    %1687 = vmatprep.subr.mxu0 0.0
    %1688 = vmatpush1.msra.mxu0 0.0
    %1689 = vmatprep.subr.mxu0 0.0
    %1690 = vmatpush1.msra.mxu0 0.0
    %1691 = vmatprep.subr.mxu0 0.0
    %1692 = vmatpush1.msra.mxu0 0.0
    %1693 = vmatprep.subr.mxu0 0.0
    %1694 = vmatpush1.msra.mxu0 0.0
    %1695 = vmatprep.subr.mxu0 0.0
    %1696 = vmatpush1.msra.mxu0 0.0
    %1697 = vmatprep.subr.mxu0 0.0
    %1698 = vmatpush1.msra.mxu0 0.0
    %1699 = vmatprep.subr.mxu0 0.0
    %1700 = vmatpush1.msra.mxu0 0.0
    %1701 = vmatprep.subr.mxu0 0.0
    %1702 = vmatpush1.msra.mxu0 0.0
    %1703 = vmatprep.subr.mxu0 0.0
    %1704 = vmatpush1.msra.mxu0 0.0
    %1705 = vmatprep.subr.mxu0 0.0
    %1706 = vmatpush1.msra.mxu0 0.0
    %1707 = vmatprep.subr.mxu0 0.0
    %1708 = vmatpush1.msra.mxu0 %v50
    %1709 = vmatprep.subr.mxu0 0.0
    %1710 = vmatpush1.msra.mxu0 %v49
    %1711 = vmatprep.subr.mxu0 0.0
    %1712 = vmatpush2.msra.mxu0 0.0
    %1713 = vmatprep.subr.mxu0 0.0
    %1714 = vmatpush2.msra.mxu0 0.0
    %1715 = vmatprep.subr.mxu0 0.0
    %1716 = vmatpush2.msra.mxu0 0.0
    %1717 = vmatprep.subr.mxu0 0.0
    %1718 = vmatpush2.msra.mxu0 0.0
    %1719 = vmatprep.subr.mxu0 0.0
    %1720 = vmatpush2.msra.mxu0 0.0
    %1721 = vmatprep.subr.mxu0 0.0
    %1722 = vmatpush2.msra.mxu0 0.0
    %1723 = vmatprep.subr.mxu0 0.0
    %1724 = vmatpush2.msra.mxu0 0.0
    %1725 = vmatprep.subr.mxu0 0.0
    %1726 = vmatpush2.msra.mxu0 0.0
    %1727 = vmatprep.subr.mxu0 0.0
    %1728 = vmatpush2.msra.mxu0 0.0
    %1729 = vmatprep.subr.mxu0 0.0
    %1730 = vmatpush2.msra.mxu0 0.0
    %1731 = vmatprep.subr.mxu0 0.0
    %1732 = vmatpush2.msra.mxu0 0.0
    %1733 = vmatprep.subr.mxu0 0.0
    %1734 = vmatpush2.msra.mxu0 0.0
    %1735 = vmatprep.subr.mxu0 0.0
    %1736 = vmatpush2.msra.mxu0 0.0
    %1737 = vmatprep.subr.mxu0 0.0
    %1738 = vmatpush2.msra.mxu0 0.0
    %1739 = vmatprep.subr.mxu0 0.0
    %1740 = vmatpush2.msra.mxu0 0.0
    %1741 = vmatprep.subr.mxu0 0.0
    %1742 = vmatpush2.msra.mxu0 0.0
    %1743 = vmatprep.mubr.f32.mxu0 0.0
    %1744 = vmatmul.mubr.f32.gmra.mxu0 %v1677
    %v1745 = vpop.f32.mrf.mxu0
    %v1746 = vadd.f32 %v1595, %v1745
    %v1747 = vpop.f32.mrf.mxu0
    %1748 = vdwg.mxu0
    %v1749 = vtanh.pop %v1746
    %1751 = vrot.lane.b32.xlu0 %v1749, 96
    %v1752 = vpop.permute.xlu0 %1751
    %vm1754 = vcmask 917248
    %1755 = vst.msk [vmem:[#allocation2] sm:$0xff] %vm1754, %v1752
    %v1756 = vsel %vm151, %v1749, 0
    %1758 = vmatprep.subr.mxu0 0.0
    %1759 = vmatpush1.msra.mxu0 0.0
    %1760 = vmatprep.subr.mxu0 0.0
    %1761 = vmatpush1.msra.mxu0 0.0
    %1762 = vmatprep.subr.mxu0 0.0
    %1763 = vmatpush1.msra.mxu0 0.0
    %1764 = vmatprep.subr.mxu0 0.0
    %1765 = vmatpush1.msra.mxu0 0.0
    %1766 = vmatprep.subr.mxu0 0.0
    %1767 = vmatpush1.msra.mxu0 0.0
    %1768 = vmatprep.subr.mxu0 0.0
    %1769 = vmatpush1.msra.mxu0 0.0
    %1770 = vmatprep.subr.mxu0 0.0
    %1771 = vmatpush1.msra.mxu0 0.0
    %1772 = vmatprep.subr.mxu0 0.0
    %1773 = vmatpush1.msra.mxu0 0.0
    %1774 = vmatprep.subr.mxu0 0.0
    %1775 = vmatpush1.msra.mxu0 0.0
    %1776 = vmatprep.subr.mxu0 0.0
    %1777 = vmatpush1.msra.mxu0 0.0
    %1778 = vmatprep.subr.mxu0 0.0
    %1779 = vmatpush1.msra.mxu0 0.0
    %1780 = vmatprep.subr.mxu0 0.0
    %1781 = vmatpush1.msra.mxu0 0.0
    %1782 = vmatprep.subr.mxu0 0.0
    %1783 = vmatpush1.msra.mxu0 0.0
    %1784 = vmatprep.subr.mxu0 0.0
    %1785 = vmatpush1.msra.mxu0 0.0
    %1786 = vmatprep.subr.mxu0 0.0
    %1787 = vmatpush1.msra.mxu0 %v52
    %1788 = vmatprep.subr.mxu0 0.0
    %1789 = vmatpush1.msra.mxu0 %v51
    %1790 = vmatprep.subr.mxu0 0.0
    %1791 = vmatpush2.msra.mxu0 0.0
    %1792 = vmatprep.subr.mxu0 0.0
    %1793 = vmatpush2.msra.mxu0 0.0
    %1794 = vmatprep.subr.mxu0 0.0
    %1795 = vmatpush2.msra.mxu0 0.0
    %1796 = vmatprep.subr.mxu0 0.0
    %1797 = vmatpush2.msra.mxu0 0.0
    %1798 = vmatprep.subr.mxu0 0.0
    %1799 = vmatpush2.msra.mxu0 0.0
    %1800 = vmatprep.subr.mxu0 0.0
    %1801 = vmatpush2.msra.mxu0 0.0
    %1802 = vmatprep.subr.mxu0 0.0
    %1803 = vmatpush2.msra.mxu0 0.0
    %1804 = vmatprep.subr.mxu0 0.0
    %1805 = vmatpush2.msra.mxu0 0.0
    %1806 = vmatprep.subr.mxu0 0.0
    %1807 = vmatpush2.msra.mxu0 0.0
    %1808 = vmatprep.subr.mxu0 0.0
    %1809 = vmatpush2.msra.mxu0 0.0
    %1810 = vmatprep.subr.mxu0 0.0
    %1811 = vmatpush2.msra.mxu0 0.0
    %1812 = vmatprep.subr.mxu0 0.0
    %1813 = vmatpush2.msra.mxu0 0.0
    %1814 = vmatprep.subr.mxu0 0.0
    %1815 = vmatpush2.msra.mxu0 0.0
    %1816 = vmatprep.subr.mxu0 0.0
    %1817 = vmatpush2.msra.mxu0 0.0
    %1818 = vmatprep.subr.mxu0 0.0
    %1819 = vmatpush2.msra.mxu0 0.0
    %1820 = vmatprep.subr.mxu0 0.0
    %1821 = vmatpush2.msra.mxu0 0.0
    %1822 = vmatprep.mubr.f32.mxu0 0.0
    %1823 = vmatmul.mubr.f32.gmra.mxu0 %v1756
    %v1824 = vpop.f32.mrf.mxu0
    %v1825 = vadd.f32 %v149, %v1824
    %v1826 = vpop.f32.mrf.mxu0
    %1827 = vdwg.mxu0
    %1828 = vmatprep.subr.mxu0 0.0
    %1829 = vmatpush1.msra.mxu0 0.0
    %1830 = vmatprep.subr.mxu0 0.0
    %1831 = vmatpush1.msra.mxu0 0.0
    %1832 = vmatprep.subr.mxu0 0.0
    %1833 = vmatpush1.msra.mxu0 0.0
    %1834 = vmatprep.subr.mxu0 0.0
    %1835 = vmatpush1.msra.mxu0 0.0
    %1836 = vmatprep.subr.mxu0 0.0
    %1837 = vmatpush1.msra.mxu0 0.0
    %1838 = vmatprep.subr.mxu0 0.0
    %1839 = vmatpush1.msra.mxu0 0.0
    %1840 = vmatprep.subr.mxu0 0.0
    %1841 = vmatpush1.msra.mxu0 0.0
    %1842 = vmatprep.subr.mxu0 0.0
    %1843 = vmatpush1.msra.mxu0 0.0
    %1844 = vmatprep.subr.mxu0 0.0
    %1845 = vmatpush1.msra.mxu0 0.0
    %1846 = vmatprep.subr.mxu0 0.0
    %1847 = vmatpush1.msra.mxu0 0.0
    %1848 = vmatprep.subr.mxu0 0.0
    %1849 = vmatpush1.msra.mxu0 0.0
    %1850 = vmatprep.subr.mxu0 0.0
    %1851 = vmatpush1.msra.mxu0 0.0
    %1852 = vmatprep.subr.mxu0 0.0
    %1853 = vmatpush1.msra.mxu0 0.0
    %1854 = vmatprep.subr.mxu0 0.0
    %1855 = vmatpush1.msra.mxu0 0.0
    %1856 = vmatprep.subr.mxu0 0.0
    %1857 = vmatpush1.msra.mxu0 %v48
    %1858 = vmatprep.subr.mxu0 0.0
    %1859 = vmatpush1.msra.mxu0 %v47
    %1860 = vmatprep.subr.mxu0 0.0
    %1861 = vmatpush2.msra.mxu0 0.0
    %1862 = vmatprep.subr.mxu0 0.0
    %1863 = vmatpush2.msra.mxu0 0.0
    %1864 = vmatprep.subr.mxu0 0.0
    %1865 = vmatpush2.msra.mxu0 0.0
    %1866 = vmatprep.subr.mxu0 0.0
    %1867 = vmatpush2.msra.mxu0 0.0
    %1868 = vmatprep.subr.mxu0 0.0
    %1869 = vmatpush2.msra.mxu0 0.0
    %1870 = vmatprep.subr.mxu0 0.0
    %1871 = vmatpush2.msra.mxu0 0.0
    %1872 = vmatprep.subr.mxu0 0.0
    %1873 = vmatpush2.msra.mxu0 0.0
    %1874 = vmatprep.subr.mxu0 0.0
    %1875 = vmatpush2.msra.mxu0 0.0
    %1876 = vmatprep.subr.mxu0 0.0
    %1877 = vmatpush2.msra.mxu0 0.0
    %1878 = vmatprep.subr.mxu0 0.0
    %1879 = vmatpush2.msra.mxu0 0.0
    %1880 = vmatprep.subr.mxu0 0.0
    %1881 = vmatpush2.msra.mxu0 0.0
    %1882 = vmatprep.subr.mxu0 0.0
    %1883 = vmatpush2.msra.mxu0 0.0
    %1884 = vmatprep.subr.mxu0 0.0
    %1885 = vmatpush2.msra.mxu0 0.0
    %1886 = vmatprep.subr.mxu0 0.0
    %1887 = vmatpush2.msra.mxu0 0.0
    %1888 = vmatprep.subr.mxu0 0.0
    %1889 = vmatpush2.msra.mxu0 0.0
    %1890 = vmatprep.subr.mxu0 0.0
    %1891 = vmatpush2.msra.mxu0 0.0
    %1892 = vmatprep.mubr.f32.mxu0 0.0
    %1893 = vmatmul.mubr.f32.gmra.mxu0 %v1677
    %v1894 = vpop.f32.mrf.mxu0
    %v1895 = vadd.f32 0.0, %v1894
    %v1896 = vpop.f32.mrf.mxu0
    %1897 = vdwg.mxu0
    %1899 = vrot.lane.b32.xlu0 %v1895, 112
    %v1900 = vpop.permute.xlu0 %1899
    %v1902 = vadd.f32 %v141, %v1900
    %v1903 = vtanh.pop %v1902
    %1905 = vrot.lane.b32.xlu0 %v1903, 16
    %v1906 = vpop.permute.xlu0 %1905
    %v1907 = vsel %vm151, %v1906, 0
    %1909 = vmatprep.subr.mxu0 0.0
    %1910 = vmatpush1.msra.mxu0 0.0
    %1911 = vmatprep.subr.mxu0 0.0
    %1912 = vmatpush1.msra.mxu0 0.0
    %1913 = vmatprep.subr.mxu0 0.0
    %1914 = vmatpush1.msra.mxu0 0.0
    %1915 = vmatprep.subr.mxu0 0.0
    %1916 = vmatpush1.msra.mxu0 0.0
    %1917 = vmatprep.subr.mxu0 0.0
    %1918 = vmatpush1.msra.mxu0 0.0
    %1919 = vmatprep.subr.mxu0 0.0
    %1920 = vmatpush1.msra.mxu0 0.0
    %1921 = vmatprep.subr.mxu0 0.0
    %1922 = vmatpush1.msra.mxu0 0.0
    %1923 = vmatprep.subr.mxu0 0.0
    %1924 = vmatpush1.msra.mxu0 0.0
    %1925 = vmatprep.subr.mxu0 0.0
    %1926 = vmatpush1.msra.mxu0 0.0
    %1927 = vmatprep.subr.mxu0 0.0
    %1928 = vmatpush1.msra.mxu0 0.0
    %1929 = vmatprep.subr.mxu0 0.0
    %1930 = vmatpush1.msra.mxu0 0.0
    %1931 = vmatprep.subr.mxu0 0.0
    %1932 = vmatpush1.msra.mxu0 0.0
    %1933 = vmatprep.subr.mxu0 0.0
    %1934 = vmatpush1.msra.mxu0 0.0
    %1935 = vmatprep.subr.mxu0 0.0
    %1936 = vmatpush1.msra.mxu0 0.0
    %1937 = vmatprep.subr.mxu0 0.0
    %1938 = vmatpush1.msra.mxu0 %v50
    %1939 = vmatprep.subr.mxu0 0.0
    %1940 = vmatpush1.msra.mxu0 %v49
    %1941 = vmatprep.subr.mxu0 0.0
    %1942 = vmatpush2.msra.mxu0 0.0
    %1943 = vmatprep.subr.mxu0 0.0
    %1944 = vmatpush2.msra.mxu0 0.0
    %1945 = vmatprep.subr.mxu0 0.0
    %1946 = vmatpush2.msra.mxu0 0.0
    %1947 = vmatprep.subr.mxu0 0.0
    %1948 = vmatpush2.msra.mxu0 0.0
    %1949 = vmatprep.subr.mxu0 0.0
    %1950 = vmatpush2.msra.mxu0 0.0
    %1951 = vmatprep.subr.mxu0 0.0
    %1952 = vmatpush2.msra.mxu0 0.0
    %1953 = vmatprep.subr.mxu0 0.0
    %1954 = vmatpush2.msra.mxu0 0.0
    %1955 = vmatprep.subr.mxu0 0.0
    %1956 = vmatpush2.msra.mxu0 0.0
    %1957 = vmatprep.subr.mxu0 0.0
    %1958 = vmatpush2.msra.mxu0 0.0
    %1959 = vmatprep.subr.mxu0 0.0
    %1960 = vmatpush2.msra.mxu0 0.0
    %1961 = vmatprep.subr.mxu0 0.0
    %1962 = vmatpush2.msra.mxu0 0.0
    %1963 = vmatprep.subr.mxu0 0.0
    %1964 = vmatpush2.msra.mxu0 0.0
    %1965 = vmatprep.subr.mxu0 0.0
    %1966 = vmatpush2.msra.mxu0 0.0
    %1967 = vmatprep.subr.mxu0 0.0
    %1968 = vmatpush2.msra.mxu0 0.0
    %1969 = vmatprep.subr.mxu0 0.0
    %1970 = vmatpush2.msra.mxu0 0.0
    %1971 = vmatprep.subr.mxu0 0.0
    %1972 = vmatpush2.msra.mxu0 0.0
    %1973 = vmatprep.mubr.f32.mxu0 0.0
    %1974 = vmatmul.mubr.f32.gmra.mxu0 %v1907
    %v1975 = vpop.f32.mrf.mxu0
    %v1976 = vadd.f32 %v1825, %v1975
    %v1977 = vpop.f32.mrf.mxu0
    %1978 = vdwg.mxu0
    %v1979 = vtanh.pop %v1976
    %1981 = vrot.lane.b32.xlu0 %v1979, 112
    %v1982 = vpop.permute.xlu0 %1981
    %vm1984 = vcmask 1048448
    %1985 = vst.msk [vmem:[#allocation2] sm:$0xff] %vm1984, %v1982
    %v1986 = vld [vmem:[#allocation2] sm:$0xff]
    %v1987 = vld [vmem:[%s9] sm:$0xff]
    %v1988 = vld [vmem:[%s9 + $0x8] sm:$0xff]
    %v1989 = vld [vmem:[%s9 + $0x10] sm:$0xff]
    %v1990 = vld [vmem:[%s9 + $0x18] sm:$0xff]
    %v1991 = vld [vmem:[%s9 + $0x20] sm:$0xff]
    %v1992 = vld [vmem:[%s9 + $0x28] sm:$0xff]
    %v1993 = vld [vmem:[%s9 + $0x30] sm:$0xff]
    %v1994 = vld [vmem:[%s9 + $0x38] sm:$0xff]
    %v1995 = vld [vmem:[%s9 + $0x40] sm:$0xff]
    %v1996 = vld [vmem:[%s9 + $0x48] sm:$0xff]
    %v1997 = vld [vmem:[%s9 + $0x50] sm:$0xff]
    %v1998 = vld [vmem:[%s9 + $0x58] sm:$0xff]
    %v1999 = vld [vmem:[%s9 + $0x60] sm:$0xff]
    %v2000 = vld [vmem:[%s9 + $0x68] sm:$0xff]
    %v2001 = vld [vmem:[%s9 + $0x70] sm:$0xff]
    %v2002 = vld [vmem:[%s9 + $0x78] sm:$0xff]
    %v2003 = vld [vmem:[#allocation3] sm:$0x1]
    %v2005 = vlaneseq
    %v2006 = vshrl.u32 %v2005, 7
    %v2007 = vsub.s32 0, %v2006
    %v2008 = vrot.slane %v2003, %v2007
    %2009 = vset.pattern.permute.xlu0 0
    %2010 = vperm.xlu0 %2009, %v2008
    %v2011 = vpop.permute.xlu0 %2010
    %2013 = vmatprep.subr.mxu0 0.0
    %2014 = vmatpush1.msra.mxu0 %v2002
    %2015 = vmatprep.subr.mxu0 0.0
    %2016 = vmatpush1.msra.mxu0 %v2001
    %2017 = vmatprep.subr.mxu0 0.0
    %2018 = vmatpush1.msra.mxu0 %v2000
    %2019 = vmatprep.subr.mxu0 0.0
    %2020 = vmatpush1.msra.mxu0 %v1999
    %2021 = vmatprep.subr.mxu0 0.0
    %2022 = vmatpush1.msra.mxu0 %v1998
    %2023 = vmatprep.subr.mxu0 0.0
    %2024 = vmatpush1.msra.mxu0 %v1997
    %2025 = vmatprep.subr.mxu0 0.0
    %2026 = vmatpush1.msra.mxu0 %v1996
    %2027 = vmatprep.subr.mxu0 0.0
    %2028 = vmatpush1.msra.mxu0 %v1995
    %2029 = vmatprep.subr.mxu0 0.0
    %2030 = vmatpush1.msra.mxu0 %v1994
    %2031 = vmatprep.subr.mxu0 0.0
    %2032 = vmatpush1.msra.mxu0 %v1993
    %2033 = vmatprep.subr.mxu0 0.0
    %2034 = vmatpush1.msra.mxu0 %v1992
    %2035 = vmatprep.subr.mxu0 0.0
    %2036 = vmatpush1.msra.mxu0 %v1991
    %2037 = vmatprep.subr.mxu0 0.0
    %2038 = vmatpush1.msra.mxu0 %v1990
    %2039 = vmatprep.subr.mxu0 0.0
    %2040 = vmatpush1.msra.mxu0 %v1989
    %2041 = vmatprep.subr.mxu0 0.0
    %2042 = vmatpush1.msra.mxu0 %v1988
    %2043 = vmatprep.subr.mxu0 0.0
    %2044 = vmatpush1.msra.mxu0 %v1987
    %2045 = vmatprep.subr.mxu0 0.0
    %2046 = vmatpush2.msra.mxu0 0.0
    %2047 = vmatprep.subr.mxu0 0.0
    %2048 = vmatpush2.msra.mxu0 0.0
    %2049 = vmatprep.subr.mxu0 0.0
    %2050 = vmatpush2.msra.mxu0 0.0
    %2051 = vmatprep.subr.mxu0 0.0
    %2052 = vmatpush2.msra.mxu0 0.0
    %2053 = vmatprep.subr.mxu0 0.0
    %2054 = vmatpush2.msra.mxu0 0.0
    %2055 = vmatprep.subr.mxu0 0.0
    %2056 = vmatpush2.msra.mxu0 0.0
    %2057 = vmatprep.subr.mxu0 0.0
    %2058 = vmatpush2.msra.mxu0 0.0
    %2059 = vmatprep.subr.mxu0 0.0
    %2060 = vmatpush2.msra.mxu0 0.0
    %2061 = vmatprep.subr.mxu0 0.0
    %2062 = vmatpush2.msra.mxu0 0.0
    %2063 = vmatprep.subr.mxu0 0.0
    %2064 = vmatpush2.msra.mxu0 0.0
    %2065 = vmatprep.subr.mxu0 0.0
    %2066 = vmatpush2.msra.mxu0 0.0
    %2067 = vmatprep.subr.mxu0 0.0
    %2068 = vmatpush2.msra.mxu0 0.0
    %2069 = vmatprep.subr.mxu0 0.0
    %2070 = vmatpush2.msra.mxu0 0.0
    %2071 = vmatprep.subr.mxu0 0.0
    %2072 = vmatpush2.msra.mxu0 0.0
    %2073 = vmatprep.subr.mxu0 0.0
    %2074 = vmatpush2.msra.mxu0 0.0
    %2075 = vmatprep.subr.mxu0 0.0
    %2076 = vmatpush2.msra.mxu0 0.0
    %2077 = vmatprep.mubr.f32.mxu0 0.0
    %2078 = vmatmul.mubr.f32.gmra.mxu0 %v1986
    %v2079 = vpop.f32.mrf.mxu0
    %v2080 = vadd.f32 %v2011, %v2079
    %v2081 = vpop.f32.mrf.mxu0
    %2082 = vdwg.mxu0
    %vm2083 = vcmask 64512
    %2084 = vst.msk [vmem:[#allocation4] sm:$0xff] %vm2083, %v2080
    %2086 = vst.msk [vmem:[#allocation6] sm:$0xff] %vm151, %v1906
    %2087 = vst.msk [vmem:[#allocation8] sm:$0xff] %vm151, %v1979
    // Predicated region
    $region46: #{tpu_custom_call.1} parent=1 // pred_check
      _
    $region47: #{tpu_custom_call.1} parent=1 // pred_check_branch
      %2089 = sbr.rel (0) target = $region49
    $region48: #{tpu_custom_call.1} parent=1 // pred_region
      %s2091 = ssub.s32 128, 128
      %2092 = vsyncadd [#allocation5], %s2091
      %s2094 = sshll.u32 [#allocation4], 4
      %s2095 = int_to_ptr.vmem [resolvable:$true] %s2094
      %2097 = dma.vmem_to_hbm [thread:$0]  %s2095, 128, %s11, [#allocation5]
    $region49: #{tpu_custom_call.1} parent=1 // pred_fallthru
      _
    // Predicated region
    $region50: #{tpu_custom_call.1} parent=1 // pred_check
      _
    $region51: #{tpu_custom_call.1} parent=1 // pred_check_branch
      %2099 = sbr.rel (0) target = $region53
    $region52: #{tpu_custom_call.1} parent=1 // pred_region
      %s2101 = ssub.s32 128, 128
      %2102 = vsyncadd [#allocation7], %s2101
      %s2104 = sshll.u32 [#allocation6], 4
      %s2105 = int_to_ptr.vmem [resolvable:$true] %s2104
      %2107 = dma.vmem_to_hbm [thread:$0]  %s2105, 128, %s12, [#allocation7]
    $region53: #{tpu_custom_call.1} parent=1 // pred_fallthru
      _
    // Predicated region
    $region54: #{tpu_custom_call.1} parent=1 // pred_check
      _
    $region55: #{tpu_custom_call.1} parent=1 // pred_check_branch
      %2109 = sbr.rel (0) target = $region57
    $region56: #{tpu_custom_call.1} parent=1 // pred_region
      %s2111 = ssub.s32 128, 128
      %2112 = vsyncadd [#allocation7], %s2111
      %s2114 = sshll.u32 [#allocation8], 4
      %s2115 = int_to_ptr.vmem [resolvable:$true] %s2114
      %2117 = dma.vmem_to_hbm [thread:$0]  %s2115, 128, %s13, [#allocation7]
    $region57: #{tpu_custom_call.1} parent=1 // pred_fallthru
      _
    // Predicated region
    $region58: #{tpu_custom_call.1} parent=1 // pred_check
      _
    $region59: #{tpu_custom_call.1} parent=1 // pred_check_branch
      %2119 = sbr.rel (0) target = $region61
    $region60: #{tpu_custom_call.1} parent=1 // pred_region
      %2120 = dma.done [#allocation5], 128
    $region61: #{tpu_custom_call.1} parent=1 // pred_fallthru
      _
    // Predicated region
    $region62: #{tpu_custom_call.1} parent=1 // pred_check
      _
    $region63: #{tpu_custom_call.1} parent=1 // pred_check_branch
      %2122 = sbr.rel (0) target = $region65
    $region64: #{tpu_custom_call.1} parent=1 // pred_region
      %2123 = dma.done [#allocation7], 128
    $region65: #{tpu_custom_call.1} parent=1 // pred_fallthru
      _
    // Predicated region
    $region66: #{tpu_custom_call.1} parent=1 // pred_check
      _
    $region67: #{tpu_custom_call.1} parent=1 // pred_check_branch
      %2125 = sbr.rel (0) target = $region69
    $region68: #{tpu_custom_call.1} parent=1 // pred_region
      %2126 = dma.done [#allocation7], 128
    $region69: #{tpu_custom_call.1} parent=1 // pred_fallthru
      _
    %2127 = vsyncpa [#allocation5], 1
    %2128 = vsyncpa [#allocation7], 1

</llo_original>
